<compile_context>
chip_gen: v7x
topology: tpu7x:2x2x1
jax: 0.10.0
libtpu: 0.0.40
codegen_flags: <defaults>
</compile_context>

<pallas_src>
import functools

import jax
import jax.numpy as jnp
from jax import lax
from jax.experimental import pallas as pl
from jax.experimental.pallas import tpu as pltpu


def _dcd_kernel(gt_ref, x_ref, o_ref,
                dist1_sc, idx1_sc, cntgt_sc, es2_sc, l1w_sc,
                *, alpha, n_lambda, frac_12, frac_21, n_x, n_gt, tx, ntiles):
    p = pl.program_id(1)   # 0: distance / argmin pass, 1: side-1 bincount pass
    t = pl.program_id(2)   # x-tile index
    col_base = t * tx

    def pow_nl(c):
        if n_lambda == 0.5:
            return jnp.sqrt(c)
        if n_lambda == 1.0:
            return c
        if n_lambda == 2.0:
            return c * c
        return jnp.exp(n_lambda * jnp.log(jnp.maximum(c, 1e-30)))

    @pl.when(jnp.logical_and(p == 0, t == 0))
    def _init():
        dist1_sc[...] = jnp.full(dist1_sc.shape, jnp.inf, jnp.float32)
        idx1_sc[...] = jnp.zeros(idx1_sc.shape, jnp.float32)
        cntgt_sc[...] = jnp.zeros(cntgt_sc.shape, jnp.float32)
        es2_sc[...] = jnp.zeros(es2_sc.shape, jnp.float32)
        l1w_sc[...] = jnp.zeros(l1w_sc.shape, jnp.float32)

    @pl.when(p == 0)
    def _pass0():
        # d[j, i] = |x_j|^2 + |g_i|^2 - 2<x_j, g_i> via one K=8 MXU matmul per tile.
        d = jnp.dot(x_ref[...], gt_ref[...],
                    preferred_element_type=jnp.float32)                     # (tx, n_gt)

        x_ids = (col_base
                 + lax.broadcasted_iota(jnp.int32, (tx, n_gt), 0)).astype(jnp.float32)
        gt_ids = lax.broadcasted_iota(jnp.int32, (tx, n_gt), 1).astype(jnp.float32)

        # ---- side 1: per-gt running min / first-argmin over x tiles.
        tmin1 = jnp.min(d, axis=0, keepdims=True)                           # (1, n_gt)
        targ1 = jnp.min(jnp.where(d == tmin1, x_ids, float(n_x)),
                        axis=0, keepdims=True)                              # (1, n_gt)
        better = tmin1 < dist1_sc[...]
        dist1_sc[...] = jnp.where(better, tmin1, dist1_sc[...])
        idx1_sc[...] = jnp.where(better, targ1, idx1_sc[...])

        # ---- side 2: per-x nearest gt, complete within the tile (full gt resident).
        dist2 = jnp.min(d, axis=1, keepdims=True)                           # (tx, 1)
        idx2 = jnp.min(jnp.where(d == dist2, gt_ids, float(n_gt)),
                       axis=1, keepdims=True)                               # (tx, 1)
        e2 = jnp.exp(-alpha * jnp.maximum(dist2, 0.0))                      # (tx, 1)
        eq2 = gt_ids == idx2                                                # one-hot rows
        # bincount(idx2) and grouped exp(-alpha*dist2), accumulated per gt bin.
        cntgt_sc[...] += jnp.sum(jnp.where(eq2, 1.0, 0.0), axis=0, keepdims=True)
        es2_sc[...] += jnp.sum(jnp.where(eq2, e2, 0.0), axis=0, keepdims=True)

    @pl.when(p == 1)
    def _pass1():
        # idx1 is now final: bincount(idx1) / grouped exp for this tile's x columns.
        x_ids = (col_base
                 + lax.broadcasted_iota(jnp.int32, (tx, n_gt), 0)).astype(jnp.float32)
        eq1 = x_ids == idx1_sc[...]                                         # (tx, n_gt)
        e1 = jnp.exp(-alpha * jnp.maximum(dist1_sc[...], 0.0))              # (1, n_gt)
        cnt1 = jnp.sum(jnp.where(eq1, 1.0, 0.0), axis=1, keepdims=True)     # (tx, 1)
        es1 = jnp.sum(jnp.where(eq1, e1, 0.0), axis=1, keepdims=True)       # (tx, 1)
        # x columns selected by no gt point have es1 == 0 -> contribute 0.
        l1w_sc[...] += jnp.sum(es1 / (pow_nl(cnt1) + 1e-6), axis=0, keepdims=True)

    @pl.when(jnp.logical_and(p == 1, t == ntiles - 1))
    def _finalize():
        s2 = jnp.sum(es2_sc[...] / (pow_nl(cntgt_sc[...]) + 1e-6),
                     axis=1, keepdims=True)                                 # (1, 1)
        loss1 = 1.0 - (frac_21 / n_gt) * l1w_sc[...]
        loss2 = 1.0 - (frac_12 / n_x) * s2
        out = 0.5 * (loss1 + loss2)                                         # (1, 1)
        o_ref[...] = jnp.broadcast_to(out, o_ref.shape)                     # (8, 128)


def _pick_tile_n_x(n_x, target):
    if n_x <= target or n_x % 128 != 0:
        return n_x
    best = 128
    t = 128
    while t <= target:
        if n_x % t == 0:
            best = t
        t += 128
    return best


def dcd_loss(x, gt, alpha=50, n_lambda=0.5, non_reg=False,
             tile_n_x=None, tile_target=512):
    """Pallas TPU implementation of DCDLoss.forward(x, gt) (scalar loss)."""
    x = x.astype(jnp.float32)
    gt = gt.astype(jnp.float32)
    b, n_x, d = x.shape
    b2, n_gt, d2 = gt.shape
    assert b == b2 and d == d2 and d <= 6

    if non_reg:
        frac_12 = max(1.0, n_x / n_gt)
        frac_21 = max(1.0, n_gt / n_x)
    else:
        frac_12 = n_x / n_gt
        frac_21 = n_gt / n_x

    if tile_n_x is None:
        tile_n_x = _pick_tile_n_x(n_x, tile_target)
    assert n_x % tile_n_x == 0
    assert tile_n_x == n_x or tile_n_x % 128 == 0
    ntiles = n_x // tile_n_x

    dp = 8  # feature dim padded to the f32 sublane tile

    # Augmented operands so a single K=8 MXU matmul yields squared distances.
    # x_aug[b, j, :] = [-2*x_j, 1, |x_j|^2, 0, 0, 0]            -> (B, n_x, 8)
    x_sq = jnp.sum(x * x, axis=2, keepdims=True)
    x_aug = jnp.concatenate(
        [-2.0 * x, jnp.ones((b, n_x, 1), jnp.float32), x_sq,
         jnp.zeros((b, n_x, dp - d - 2), jnp.float32)], axis=2)
    # gt_aug[b, :, i] = [g_i, |g_i|^2, 1, 0, 0, 0]              -> (B, 8, n_gt)
    gt_t = jnp.transpose(gt, (0, 2, 1))
    gt_sq = jnp.sum(gt * gt, axis=2)[:, None, :]
    gt_aug = jnp.concatenate(
        [gt_t, gt_sq, jnp.ones((b, 1, n_gt), jnp.float32),
         jnp.zeros((b, dp - d - 2, n_gt), jnp.float32)], axis=1)

    kernel = functools.partial(
        _dcd_kernel,
        alpha=float(alpha), n_lambda=float(n_lambda),
        frac_12=float(frac_12), frac_21=float(frac_21),
        n_x=n_x, n_gt=n_gt, tx=tile_n_x, ntiles=ntiles)

    per_batch = pl.pallas_call(
        kernel,
        out_shape=jax.ShapeDtypeStruct((b, 8, 128), jnp.float32),
        grid_spec=pltpu.PrefetchScalarGridSpec(
            num_scalar_prefetch=0,
            grid=(b, 2, ntiles),
            in_specs=[
                pl.BlockSpec((None, dp, n_gt), lambda ib, p, t: (ib, 0, 0)),
                pl.BlockSpec((None, tile_n_x, dp), lambda ib, p, t: (ib, t, 0)),
            ],
            out_specs=pl.BlockSpec((None, 8, 128), lambda ib, p, t: (ib, 0, 0)),
            scratch_shapes=[
                pltpu.VMEM((1, n_gt), jnp.float32),   # dist1 running min
                pltpu.VMEM((1, n_gt), jnp.float32),   # idx1 running argmin (exact f32 ints)
                pltpu.VMEM((1, n_gt), jnp.float32),   # bincount(idx2)
                pltpu.VMEM((1, n_gt), jnp.float32),   # grouped exp(-a*dist2)
                pltpu.VMEM((1, 1), jnp.float32),      # side-1 weighted-sum accumulator
            ],
        ),
        compiler_params=pltpu.CompilerParams(
            dimension_semantics=("parallel", "arbitrary", "arbitrary"),
            vmem_limit_bytes=32 * 1024 * 1024),
    )(gt_aug, x_aug)

    # final mean over batch (tiny glue)
    return jnp.mean(per_batch[:, 0, 0])


def dcd_loss_ref(x, gt, alpha=50, n_lambda=0.5):
    """Pure-JAX reference mirroring the PyTorch forward semantics."""
    x = x.astype(jnp.float32)
    gt = gt.astype(jnp.float32)
    b, n_x, _ = x.shape
    _, n_gt, _ = gt.shape
    frac_12 = n_x / n_gt
    frac_21 = n_gt / n_x
    diff = gt[:, :, None, :] - x[:, None, :, :]
    d = jnp.sum(diff * diff, axis=-1)                  # (B, n_gt, n_x)
    dist1 = jnp.min(d, axis=2)
    idx1 = jnp.argmin(d, axis=2)
    dist2 = jnp.min(d, axis=1)
    idx2 = jnp.argmin(d, axis=1)

    def per_b(d1, i1, d2, i2):
        c1 = jnp.sum(i1[:, None] == i1[None, :], axis=1).astype(jnp.float32)
        w1 = frac_21 / (c1 ** n_lambda + 1e-6)
        l1 = jnp.mean(1.0 - jnp.exp(-d1 * alpha) * w1)
        c2 = jnp.sum(i2[:, None] == i2[None, :], axis=1).astype(jnp.float32)
        w2 = frac_12 / (c2 ** n_lambda + 1e-6)
        l2 = jnp.mean(1.0 - jnp.exp(-d2 * alpha) * w2)
        return 0.5 * (l1 + l2)

    return jnp.mean(jax.vmap(per_b)(dist1, idx1, dist2, idx2))


if __name__ == "__main__":
    key = jax.random.PRNGKey(0)
    k1, k2, k3, k4 = jax.random.split(key, 4)

    # Case 1: n_x != n_gt, single x tile.
    B, N_X, N_GT = 2, 128, 256
    x1 = jax.random.normal(k1, (B, N_X, 3), jnp.float32)
    gt1 = jax.random.normal(k2, (B, N_GT, 3), jnp.float32)
    out1 = dcd_loss(x1, gt1)
    jax.block_until_ready(out1)
    ref1 = dcd_loss_ref(x1, gt1)
    assert jnp.allclose(out1, ref1, rtol=2e-3, atol=2e-4), (out1, ref1)

    # Case 2: forces the multi-tile path (2 x-tiles, running min/argmin across tiles).
    B, N_X, N_GT = 2, 256, 256
    x2 = jax.random.normal(k3, (B, N_X, 3), jnp.float32)
    gt2 = jax.random.normal(k4, (B, N_GT, 3), jnp.float32)
    out2 = dcd_loss(x2, gt2, tile_n_x=128)
    jax.block_until_ready(out2)
    ref2 = dcd_loss_ref(x2, gt2)
    assert jnp.allclose(out2, ref2, rtol=2e-3, atol=2e-4), (out2, ref2)

    print("KERNEL_OK")
</pallas_src>

<mosaic_0001>
module attributes {stable_mosaic.version = 11 : i64} {
  func.func @_dcd_kernel(%arg0: i32, %arg1: i32, %arg2: i32, %arg3: memref<1x8x256xf32, #tpu.memory_space<vmem>>, %arg4: memref<1x128x8xf32, #tpu.memory_space<vmem>>, %arg5: memref<1x8x128xf32, #tpu.memory_space<vmem>>, %arg6: memref<1x256xf32, #tpu.memory_space<vmem>>, %arg7: memref<1x256xf32, #tpu.memory_space<vmem>>, %arg8: memref<1x256xf32, #tpu.memory_space<vmem>>, %arg9: memref<1x256xf32, #tpu.memory_space<vmem>>, %arg10: memref<1x1xf32, #tpu.memory_space<vmem>>) attributes {dimension_semantics = [#tpu.dimension_semantics<parallel>, #tpu.dimension_semantics<arbitrary>, #tpu.dimension_semantics<arbitrary>], iteration_bounds = array<i64: 2, 2, 1>, scalar_prefetch = 0 : i64, scratch_operands = 5 : i64, tpu.core_type = #tpu.core_type<tc>, window_params = [{transform_indices = @transform_0, window_bounds = array<i64: 1, 8, 256>}, {transform_indices = @transform_1, window_bounds = array<i64: 1, 128, 8>}, {transform_indices = @transform_2, window_bounds = array<i64: 1, 8, 128>}]} {
    %c128_i32 = arith.constant 128 : i32
    %0 = arith.muli %arg2, %c128_i32 : i32
    %c0_i32 = arith.constant 0 : i32
    %1 = arith.cmpi eq, %arg1, %c0_i32 : i32
    %c0_i32_0 = arith.constant 0 : i32
    %2 = arith.cmpi eq, %arg2, %c0_i32_0 : i32
    %3 = arith.andi %1, %2 : i1
    %4 = arith.extui %3 : i1 to i32
    %c0_i32_1 = arith.constant 0 : i32
    %5 = arith.cmpi ne, %4, %c0_i32_1 : i32
    scf.if %5 {
      %cst = arith.constant 0x7F800000 : f32
      %17 = vector.broadcast %cst : f32 to vector<1x256xf32>
      %c0 = arith.constant 0 : index
      %c0_8 = arith.constant 0 : index
      %18 = vector.load %arg6[%c0, %c0_8] : memref<1x256xf32, #tpu.memory_space<vmem>>, vector<1x256xf32>
      tpu.vector_store %arg6[%c0, %c0_8], %17 {strides = array<i32>} : memref<1x256xf32, #tpu.memory_space<vmem>>, vector<1x256xf32>,
      %cst_9 = arith.constant 0.000000e+00 : f32
      %19 = vector.broadcast %cst_9 : f32 to vector<1x256xf32>
      %c0_10 = arith.constant 0 : index
      %c0_11 = arith.constant 0 : index
      %20 = vector.load %arg7[%c0_10, %c0_11] : memref<1x256xf32, #tpu.memory_space<vmem>>, vector<1x256xf32>
      tpu.vector_store %arg7[%c0_10, %c0_11], %19 {strides = array<i32>} : memref<1x256xf32, #tpu.memory_space<vmem>>, vector<1x256xf32>,
      %cst_12 = arith.constant 0.000000e+00 : f32
      %21 = vector.broadcast %cst_12 : f32 to vector<1x256xf32>
      %c0_13 = arith.constant 0 : index
      %c0_14 = arith.constant 0 : index
      %22 = vector.load %arg8[%c0_13, %c0_14] : memref<1x256xf32, #tpu.memory_space<vmem>>, vector<1x256xf32>
      tpu.vector_store %arg8[%c0_13, %c0_14], %21 {strides = array<i32>} : memref<1x256xf32, #tpu.memory_space<vmem>>, vector<1x256xf32>,
      %cst_15 = arith.constant 0.000000e+00 : f32
      %23 = vector.broadcast %cst_15 : f32 to vector<1x256xf32>
      %c0_16 = arith.constant 0 : index
      %c0_17 = arith.constant 0 : index
      %24 = vector.load %arg9[%c0_16, %c0_17] : memref<1x256xf32, #tpu.memory_space<vmem>>, vector<1x256xf32>
      tpu.vector_store %arg9[%c0_16, %c0_17], %23 {strides = array<i32>} : memref<1x256xf32, #tpu.memory_space<vmem>>, vector<1x256xf32>,
      %cst_18 = arith.constant 0.000000e+00 : f32
      %25 = vector.broadcast %cst_18 : f32 to vector<1x1xf32>
      %c0_19 = arith.constant 0 : index
      %c0_20 = arith.constant 0 : index
      %26 = vector.load %arg10[%c0_19, %c0_20] : memref<1x1xf32, #tpu.memory_space<vmem>>, vector<1x1xf32>
      tpu.vector_store %arg10[%c0_19, %c0_20], %25 {strides = array<i32>} : memref<1x1xf32, #tpu.memory_space<vmem>>, vector<1x1xf32>,
    } else {
    }
    %c0_i32_2 = arith.constant 0 : i32
    %6 = arith.cmpi eq, %arg1, %c0_i32_2 : i32
    %7 = arith.extui %6 : i1 to i32
    %c0_i32_3 = arith.constant 0 : i32
    %8 = arith.cmpi ne, %7, %c0_i32_3 : i32
    scf.if %8 {
      %c0 = arith.constant 0 : index
      %c0_8 = arith.constant 0 : index
      %c0_9 = arith.constant 0 : index
      %17 = vector.load %arg4[%c0, %c0_8, %c0_9] : memref<1x128x8xf32, #tpu.memory_space<vmem>>, vector<1x128x8xf32>
      %18 = vector.shape_cast %17 : vector<1x128x8xf32> to vector<128x8xf32>
      %c0_10 = arith.constant 0 : index
      %c0_11 = arith.constant 0 : index
      %c0_12 = arith.constant 0 : index
      %19 = vector.load %arg3[%c0_10, %c0_11, %c0_12] : memref<1x8x256xf32, #tpu.memory_space<vmem>>, vector<1x8x256xf32>
      %20 = vector.shape_cast %19 : vector<1x8x256xf32> to vector<8x256xf32>
      %cst = arith.constant dense<0.000000e+00> : vector<128x256xf32>
      %21 = tpu.matmul %18, %20, %cst {dimension_numbers = #tpu.dot_dimension_numbers<[1], [0], [0], [1], [0, 0, 1, 1], [], []>} : vector<128x8xf32>, vector<8x256xf32>, vector<128x256xf32> -> vector<128x256xf32>
      %22 = tpu.iota {dimensions = array<i32: 0>} : vector<128x256xi32>
      %23 = vector.broadcast %0 : i32 to vector<128x256xi32>
      %24 = arith.addi %23, %22 : vector<128x256xi32>
      %25 = arith.sitofp %24 : vector<128x256xi32> to vector<128x256xf32>
      %26 = tpu.iota {dimensions = array<i32: 1>} : vector<128x256xi32>
      %27 = arith.sitofp %26 : vector<128x256xi32> to vector<128x256xf32>
      %cst_13 = arith.constant dense<0x7F800000> : vector<256xf32>
      %28 = vector.multi_reduction <minimumf>, %21, %cst_13 [0] : vector<128x256xf32> to vector<256xf32>
      %29 = vector.shape_cast %28 : vector<256xf32> to vector<1x256xf32>
      %30 = vector.broadcast %29 : vector<1x256xf32> to vector<128x256xf32>
      %31 = arith.cmpf oeq, %21, %30 : vector<128x256xf32>
      %cst_14 = arith.constant 1.280000e+02 : f32
      %32 = vector.broadcast %cst_14 : f32 to vector<128x256xf32>
      %33 = arith.select %31, %25, %32 : vector<128x256xi1>, vector<128x256xf32>
      %cst_15 = arith.constant dense<0x7F800000> : vector<256xf32>
      %34 = vector.multi_reduction <minimumf>, %33, %cst_15 [0] : vector<128x256xf32> to vector<256xf32>
      %35 = vector.shape_cast %34 : vector<256xf32> to vector<1x256xf32>
      %c0_16 = arith.constant 0 : index
      %c0_17 = arith.constant 0 : index
      %36 = vector.load %arg6[%c0_16, %c0_17] : memref<1x256xf32, #tpu.memory_space<vmem>>, vector<1x256xf32>
      %37 = arith.cmpf olt, %29, %36 : vector<1x256xf32>
      %c0_18 = arith.constant 0 : index
      %c0_19 = arith.constant 0 : index
      %38 = vector.load %arg6[%c0_18, %c0_19] : memref<1x256xf32, #tpu.memory_space<vmem>>, vector<1x256xf32>
      %39 = arith.select %37, %29, %38 : vector<1x256xi1>, vector<1x256xf32>
      %c0_20 = arith.constant 0 : index
      %c0_21 = arith.constant 0 : index
      %40 = vector.load %arg6[%c0_20, %c0_21] : memref<1x256xf32, #tpu.memory_space<vmem>>, vector<1x256xf32>
      tpu.vector_store %arg6[%c0_20, %c0_21], %39 {strides = array<i32>} : memref<1x256xf32, #tpu.memory_space<vmem>>, vector<1x256xf32>,
      %c0_22 = arith.constant 0 : index
      %c0_23 = arith.constant 0 : index
      %41 = vector.load %arg7[%c0_22, %c0_23] : memref<1x256xf32, #tpu.memory_space<vmem>>, vector<1x256xf32>
      %42 = arith.select %37, %35, %41 : vector<1x256xi1>, vector<1x256xf32>
      %c0_24 = arith.constant 0 : index
      %c0_25 = arith.constant 0 : index
      %43 = vector.load %arg7[%c0_24, %c0_25] : memref<1x256xf32, #tpu.memory_space<vmem>>, vector<1x256xf32>
      tpu.vector_store %arg7[%c0_24, %c0_25], %42 {strides = array<i32>} : memref<1x256xf32, #tpu.memory_space<vmem>>, vector<1x256xf32>,
      %cst_26 = arith.constant dense<0x7F800000> : vector<128xf32>
      %44 = vector.multi_reduction <minimumf>, %21, %cst_26 [1] : vector<128x256xf32> to vector<128xf32>
      %45 = vector.shape_cast %44 : vector<128xf32> to vector<128x1xf32>
      %46 = vector.broadcast %45 : vector<128x1xf32> to vector<128x256xf32>
      %47 = arith.cmpf oeq, %21, %46 : vector<128x256xf32>
      %cst_27 = arith.constant 2.560000e+02 : f32
      %48 = vector.broadcast %cst_27 : f32 to vector<128x256xf32>
      %49 = arith.select %47, %27, %48 : vector<128x256xi1>, vector<128x256xf32>
      %cst_28 = arith.constant dense<0x7F800000> : vector<128xf32>
      %50 = vector.multi_reduction <minimumf>, %49, %cst_28 [1] : vector<128x256xf32> to vector<128xf32>
      %51 = vector.shape_cast %50 : vector<128xf32> to vector<128x1xf32>
      %cst_29 = arith.constant 0.000000e+00 : f32
      %52 = vector.broadcast %cst_29 : f32 to vector<128x1xf32>
      %53 = arith.maximumf %45, %52 : vector<128x1xf32>
      %cst_30 = arith.constant -5.000000e+01 : f32
      %54 = vector.broadcast %cst_30 : f32 to vector<128x1xf32>
      %55 = arith.mulf %54, %53 : vector<128x1xf32>
      %56 = math.exp %55 : vector<128x1xf32>
      %57 = vector.broadcast %51 : vector<128x1xf32> to vector<128x256xf32>
      %58 = arith.cmpf oeq, %27, %57 : vector<128x256xf32>
      %c0_31 = arith.constant 0 : index
      %c0_32 = arith.constant 0 : index
      %59 = vector.load %arg8[%c0_31, %c0_32] : memref<1x256xf32, #tpu.memory_space<vmem>>, vector<1x256xf32>
      %cst_33 = arith.constant 1.000000e+00 : f32
      %cst_34 = arith.constant 0.000000e+00 : f32
      %60 = vector.broadcast %cst_33 : f32 to vector<128x256xf32>
      %61 = vector.broadcast %cst_34 : f32 to vector<128x256xf32>
      %62 = arith.select %58, %60, %61 : vector<128x256xi1>, vector<128x256xf32>
      %cst_35 = arith.constant dense<0.000000e+00> : vector<256xf32>
      %63 = vector.multi_reduction <add>, %62, %cst_35 [0] : vector<128x256xf32> to vector<256xf32>
      %64 = vector.shape_cast %63 : vector<256xf32> to vector<1x256xf32>
      %65 = arith.addf %59, %64 : vector<1x256xf32>
      %c0_36 = arith.constant 0 : index
      %c0_37 = arith.constant 0 : index
      %66 = vector.load %arg8[%c0_36, %c0_37] : memref<1x256xf32, #tpu.memory_space<vmem>>, vector<1x256xf32>
      tpu.vector_store %arg8[%c0_36, %c0_37], %65 {strides = array<i32>} : memref<1x256xf32, #tpu.memory_space<vmem>>, vector<1x256xf32>,
      %c0_38 = arith.constant 0 : index
      %c0_39 = arith.constant 0 : index
      %67 = vector.load %arg9[%c0_38, %c0_39] : memref<1x256xf32, #tpu.memory_space<vmem>>, vector<1x256xf32>
      %cst_40 = arith.constant 0.000000e+00 : f32
      %68 = vector.shape_cast %56 : vector<128x1xf32> to vector<128x1xf32>
      %69 = vector.broadcast %68 : vector<128x1xf32> to vector<128x256xf32>
      %70 = vector.broadcast %cst_40 : f32 to vector<128x256xf32>
      %71 = arith.select %58, %69, %70 : vector<128x256xi1>, vector<128x256xf32>
      %cst_41 = arith.constant dense<0.000000e+00> : vector<256xf32>
      %72 = vector.multi_reduction <add>, %71, %cst_41 [0] : vector<128x256xf32> to vector<256xf32>
      %73 = vector.shape_cast %72 : vector<256xf32> to vector<1x256xf32>
      %74 = arith.addf %67, %73 : vector<1x256xf32>
      %c0_42 = arith.constant 0 : index
      %c0_43 = arith.constant 0 : index
      %75 = vector.load %arg9[%c0_42, %c0_43] : memref<1x256xf32, #tpu.memory_space<vmem>>, vector<1x256xf32>
      tpu.vector_store %arg9[%c0_42, %c0_43], %74 {strides = array<i32>} : memref<1x256xf32, #tpu.memory_space<vmem>>, vector<1x256xf32>,
    } else {
    }
    %c1_i32 = arith.constant 1 : i32
    %9 = arith.cmpi eq, %arg1, %c1_i32 : i32
    %10 = arith.extui %9 : i1 to i32
    %c0_i32_4 = arith.constant 0 : i32
    %11 = arith.cmpi ne, %10, %c0_i32_4 : i32
    scf.if %11 {
      %17 = tpu.iota {dimensions = array<i32: 0>} : vector<128x256xi32>
      %18 = vector.broadcast %0 : i32 to vector<128x256xi32>
      %19 = arith.addi %18, %17 : vector<128x256xi32>
      %20 = arith.sitofp %19 : vector<128x256xi32> to vector<128x256xf32>
      %c0 = arith.constant 0 : index
      %c0_8 = arith.constant 0 : index
      %21 = vector.load %arg7[%c0, %c0_8] : memref<1x256xf32, #tpu.memory_space<vmem>>, vector<1x256xf32>
      %22 = vector.broadcast %21 : vector<1x256xf32> to vector<128x256xf32>
      %23 = arith.cmpf oeq, %20, %22 : vector<128x256xf32>
      %c0_9 = arith.constant 0 : index
      %c0_10 = arith.constant 0 : index
      %24 = vector.load %arg6[%c0_9, %c0_10] : memref<1x256xf32, #tpu.memory_space<vmem>>, vector<1x256xf32>
      %cst = arith.constant 0.000000e+00 : f32
      %25 = vector.broadcast %cst : f32 to vector<1x256xf32>
      %26 = arith.maximumf %24, %25 : vector<1x256xf32>
      %cst_11 = arith.constant -5.000000e+01 : f32
      %27 = vector.broadcast %cst_11 : f32 to vector<1x256xf32>
      %28 = arith.mulf %27, %26 : vector<1x256xf32>
      %29 = math.exp %28 : vector<1x256xf32>
      %cst_12 = arith.constant 1.000000e+00 : f32
      %cst_13 = arith.constant 0.000000e+00 : f32
      %30 = vector.broadcast %cst_12 : f32 to vector<128x256xf32>
      %31 = vector.broadcast %cst_13 : f32 to vector<128x256xf32>
      %32 = arith.select %23, %30, %31 : vector<128x256xi1>, vector<128x256xf32>
      %cst_14 = arith.constant dense<0.000000e+00> : vector<128xf32>
      %33 = vector.multi_reduction <add>, %32, %cst_14 [1] : vector<128x256xf32> to vector<128xf32>
      %34 = vector.shape_cast %33 : vector<128xf32> to vector<128x1xf32>
      %cst_15 = arith.constant 0.000000e+00 : f32
      %35 = vector.shape_cast %29 : vector<1x256xf32> to vector<1x256xf32>
      %36 = vector.broadcast %35 : vector<1x256xf32> to vector<128x256xf32>
      %37 = vector.broadcast %cst_15 : f32 to vector<128x256xf32>
      %38 = arith.select %23, %36, %37 : vector<128x256xi1>, vector<128x256xf32>
      %cst_16 = arith.constant dense<0.000000e+00> : vector<128xf32>
      %39 = vector.multi_reduction <add>, %38, %cst_16 [1] : vector<128x256xf32> to vector<128xf32>
      %40 = vector.shape_cast %39 : vector<128xf32> to vector<128x1xf32>
      %c0_17 = arith.constant 0 : index
      %c0_18 = arith.constant 0 : index
      %41 = vector.load %arg10[%c0_17, %c0_18] : memref<1x1xf32, #tpu.memory_space<vmem>>, vector<1x1xf32>
      %42 = math.sqrt %34 : vector<128x1xf32>
      %cst_19 = arith.constant 9.99999997E-7 : f32
      %43 = vector.broadcast %cst_19 : f32 to vector<128x1xf32>
      %44 = arith.addf %42, %43 : vector<128x1xf32>
      %45 = arith.divf %40, %44 : vector<128x1xf32>
      %cst_20 = arith.constant dense<0.000000e+00> : vector<1xf32>
      %46 = vector.multi_reduction <add>, %45, %cst_20 [0] : vector<128x1xf32> to vector<1xf32>
      %47 = vector.shape_cast %46 : vector<1xf32> to vector<1x1xf32>
      %48 = arith.addf %41, %47 : vector<1x1xf32>
      %c0_21 = arith.constant 0 : index
      %c0_22 = arith.constant 0 : index
      %49 = vector.load %arg10[%c0_21, %c0_22] : memref<1x1xf32, #tpu.memory_space<vmem>>, vector<1x1xf32>
      tpu.vector_store %arg10[%c0_21, %c0_22], %48 {strides = array<i32>} : memref<1x1xf32, #tpu.memory_space<vmem>>, vector<1x1xf32>,
    } else {
    }
    %c1_i32_5 = arith.constant 1 : i32
    %12 = arith.cmpi eq, %arg1, %c1_i32_5 : i32
    %c0_i32_6 = arith.constant 0 : i32
    %13 = arith.cmpi eq, %arg2, %c0_i32_6 : i32
    %14 = arith.andi %12, %13 : i1
    %15 = arith.extui %14 : i1 to i32
    %c0_i32_7 = arith.constant 0 : i32
    %16 = arith.cmpi ne, %15, %c0_i32_7 : i32
    scf.if %16 {
      %c0 = arith.constant 0 : index
      %c0_8 = arith.constant 0 : index
      %17 = vector.load %arg9[%c0, %c0_8] : memref<1x256xf32, #tpu.memory_space<vmem>>, vector<1x256xf32>
      %c0_9 = arith.constant 0 : index
      %c0_10 = arith.constant 0 : index
      %18 = vector.load %arg8[%c0_9, %c0_10] : memref<1x256xf32, #tpu.memory_space<vmem>>, vector<1x256xf32>
      %19 = math.sqrt %18 : vector<1x256xf32>
      %cst = arith.constant 9.99999997E-7 : f32
      %20 = vector.broadcast %cst : f32 to vector<1x256xf32>
      %21 = arith.addf %19, %20 : vector<1x256xf32>
      %22 = arith.divf %17, %21 : vector<1x256xf32>
      %cst_11 = arith.constant dense<0.000000e+00> : vector<1xf32>
      %23 = vector.multi_reduction <add>, %22, %cst_11 [1] : vector<1x256xf32> to vector<1xf32>
      %24 = vector.shape_cast %23 : vector<1xf32> to vector<1x1xf32>
      %c0_12 = arith.constant 0 : index
      %c0_13 = arith.constant 0 : index
      %25 = vector.load %arg10[%c0_12, %c0_13] : memref<1x1xf32, #tpu.memory_space<vmem>>, vector<1x1xf32>
      %cst_14 = arith.constant 7.812500e-03 : f32
      %26 = vector.broadcast %cst_14 : f32 to vector<1x1xf32>
      %27 = arith.mulf %26, %25 : vector<1x1xf32>
      %cst_15 = arith.constant 1.000000e+00 : f32
      %28 = vector.broadcast %cst_15 : f32 to vector<1x1xf32>
      %29 = arith.subf %28, %27 : vector<1x1xf32>
      %cst_16 = arith.constant 3.906250e-03 : f32
      %30 = vector.broadcast %cst_16 : f32 to vector<1x1xf32>
      %31 = arith.mulf %30, %24 : vector<1x1xf32>
      %cst_17 = arith.constant 1.000000e+00 : f32
      %32 = vector.broadcast %cst_17 : f32 to vector<1x1xf32>
      %33 = arith.subf %32, %31 : vector<1x1xf32>
      %34 = arith.addf %29, %33 : vector<1x1xf32>
      %cst_18 = arith.constant 5.000000e-01 : f32
      %35 = vector.broadcast %cst_18 : f32 to vector<1x1xf32>
      %36 = arith.mulf %35, %34 : vector<1x1xf32>
      %37 = vector.shape_cast %36 : vector<1x1xf32> to vector<1x1xf32>
      %38 = vector.broadcast %37 : vector<1x1xf32> to vector<8x128xf32>
      %c0_19 = arith.constant 0 : index
      %c0_20 = arith.constant 0 : index
      %c0_21 = arith.constant 0 : index
      %39 = vector.load %arg5[%c0_19, %c0_20, %c0_21] : memref<1x8x128xf32, #tpu.memory_space<vmem>>, vector<1x8x128xf32>
      %40 = vector.shape_cast %39 : vector<1x8x128xf32> to vector<8x128xf32>
      %41 = vector.shape_cast %38 : vector<8x128xf32> to vector<1x8x128xf32>
      tpu.vector_store %arg5[%c0_19, %c0_20, %c0_21], %41 {strides = array<i32>} : memref<1x8x128xf32, #tpu.memory_space<vmem>>, vector<1x8x128xf32>,
    } else {
    }
    return
  }
  func.func @transform_0(%arg0: i32, %arg1: i32, %arg2: i32) -> (i32, i32, i32) {
    %c0_i32 = arith.constant 0 : i32
    %c0_i32_0 = arith.constant 0 : i32
    %c0_i32_1 = arith.constant 0 : i32
    return %arg0, %c0_i32, %c0_i32_0 : i32, i32, i32
  }
  func.func @transform_1(%arg0: i32, %arg1: i32, %arg2: i32) -> (i32, i32, i32) {
    %c0_i32 = arith.constant 0 : i32
    %c0_i32_0 = arith.constant 0 : i32
    return %arg0, %arg2, %c0_i32 : i32, i32, i32
  }
  func.func @transform_2(%arg0: i32, %arg1: i32, %arg2: i32) -> (i32, i32, i32) {
    %c0_i32 = arith.constant 0 : i32
    %c0_i32_0 = arith.constant 0 : i32
    %c0_i32_1 = arith.constant 0 : i32
    return %arg0, %c0_i32, %c0_i32_0 : i32, i32, i32
  }
}

</mosaic_0001>

<llo_original>
// kernel: tpu_custom_call.1
$region0: #{tpu_custom_call.1}
  #allocation0 [shape = 'u32[]', space=smem, size = 0x4, offset = 0x4, fixed_abs, tag = 'smem constant byte address 0x4 - core index']
  #allocation1 [shape = 'u32[144,128]{1,0:T(1,128)}', space=vmem, size = 0x12000, scoped, tag = 'internal scratch']
  #allocation2 [shape = 'f32[1,256]{1,0:T(1,128)}', space=vmem, size = 0x400, scoped, tag = 'scratch operand']
  #allocation3 [shape = 'f32[1,256]{1,0:T(1,128)}', space=vmem, size = 0x400, scoped, tag = 'scratch operand']
  #allocation4 [shape = 'f32[1,256]{1,0:T(1,128)}', space=vmem, size = 0x400, scoped, tag = 'scratch operand']
  #allocation5 [shape = 'f32[1,256]{1,0:T(1,128)}', space=vmem, size = 0x400, scoped, tag = 'scratch operand']
  #allocation6 [shape = 'f32[1,1]{1,0:T(1,128)}', space=vmem, size = 0x200, scoped, tag = 'scratch operand']
  %s0 = inlined_call_operand.vmem [shape: f32[2,8,256], index: 0, kind: input, shape index: {}]
  %s1 = inlined_call_operand.vmem [shape: f32[2,128,8], index: 1, kind: input, shape index: {}]
  %s2 = inlined_call_operand.hbm [shape: f32[2,8,128], index: 2, kind: output, shape index: {}]
  %s3 = sld [smem:[#allocation0]]
  $region57: #{tpu_custom_call.1} parent=0
    _
  %s5 = ssub.s32 1, %s3
  %s6 = scalar_select 0, %s5, %s3
  $region1: #{tpu_custom_call.1} parent=0
    #allocation7 [shape = 'u8[8192]{0}', space=vmem, size = 0x2000, scoped, tag = 'output window, operand 0']
    #allocation8 [shape = 's32[2]{0}', space=sflag, size = 0x8, scoped, tag = 'scoped memory for tpu_custom_call.1']
    %7 = vsyncpa [#allocation8], 0
    %s8 = scalar_lea.sflag [#allocation8], 1
    %9 = vsyncpa %s8, 0
    loop: start=0, step=1, limit=6
    $region2: #{tpu_custom_call.1} parent=1 // loop_pre_header
      _
    $region3: #{tpu_custom_call.1} parent=1 // loop_header
      %s11 = sphi 0, %s15
      %p12 = scmp.ge.s32.totalorder %s11, 6
      %s18 = sphi 0, %s37
      %s19 = sphi 0, %s33
      %s20 = sphi 0, %s29
      %s21 = sphi 0, %s18
      %s22 = sphi 0, %s19
      %s23 = sphi 0, %s20
      %s24 = sphi 0, %s21
      %s25 = sphi 0, %s22
      %s26 = sphi 0, %s23
      %s40 = sphi 0, %s42
      %s43 = sphi 0, %s40
      %s44 = sphi 0, %s43
      %s60 = sphi 0, %s44
      %s68 = sphi 0, %s70
      %s71 = sphi 0, %s68
      %s72 = sphi 0, %s71
      %s88 = sphi 0, %s72
      %s94 = sphi 0, %s96
      %s97 = sphi 0, %s94
      %s98 = sphi 0, %s97
      %s114 = sphi 0, %s98
    $region4: #{tpu_custom_call.1} parent=1 // loop_header_branch
      %14 = sbr.rel (%p12) target = $region8
    $region5: #{tpu_custom_call.1} parent=1 // loop_body
      %s16 = ssub.s32 %s11, 1
      %s17 = ssub.s32 %s11, 2
      %s27 = sadd.s32 1, %s20
      %p28 = scmp.ge.s32.totalorder %s27, 1
      %s29 = scalar_select %p28, 0, %s27
      %s30 = sadd.s32 1, %s19
      %s31 = scalar_select %p28, %s30, %s19
      %p32 = scmp.ge.s32.totalorder %s31, 2
      %s33 = scalar_select %p32, 0, %s31
      %s34 = sadd.s32 1, %s18
      %s35 = scalar_select %p32, %s34, %s18
      %p36 = scmp.ge.s32.totalorder %s35, 2
      %s37 = scalar_select %p36, 0, %s35
      %s38 = ssub.s32 %s18, %s37
      %p39 = scmp.eq.s32.totalorder %s38, 0
      %s41 = sadd.s32 %s40, 1
      %s42 = scalar_select %p39, %s40, %s41
      %p45 = pneg %p39
      %p46 = scmp.eq.s32.totalorder %s11, 3
      %p47 = por %p45, %p46
      %p48 = scmp.ne.s32.totalorder %s40, %s43
      %p49 = scmp.eq.s32.totalorder %s11, 0
      %p50 = por %p48, %p49
      %p51 = scmp.ne.s32.totalorder %s40, %s43
      %p52 = scmp.eq.s32.totalorder %s16, 3
      %p53 = por %p51, %p52
      %p54 = scmp.ne.s32.totalorder %s43, %s44
      %p55 = scmp.eq.s32.totalorder %s16, 0
      %p56 = por %p54, %p55
      %p57 = scmp.ne.s32.totalorder %s43, %s44
      %p58 = scmp.eq.s32.totalorder %s17, 3
      %p59 = por %p57, %p58
      %p61 = scmp.ne.s32.totalorder %s44, %s60
      %p62 = scmp.eq.s32.totalorder %s17, 0
      %p63 = por %p61, %p62
      %s64 = ssub.s32 %s18, %s37
      %s65 = ssub.s32 %s20, %s29
      %s66 = sor.u32 %s64, %s65
      %p67 = scmp.eq.s32.totalorder %s66, 0
      %s69 = sadd.s32 %s68, 1
      %s70 = scalar_select %p67, %s68, %s69
      %p73 = pneg %p67
      %p74 = scmp.eq.s32.totalorder %s11, 3
      %p75 = por %p73, %p74
      %p76 = scmp.ne.s32.totalorder %s68, %s71
      %p77 = scmp.eq.s32.totalorder %s11, 0
      %p78 = por %p76, %p77
      %p79 = scmp.ne.s32.totalorder %s68, %s71
      %p80 = scmp.eq.s32.totalorder %s16, 3
      %p81 = por %p79, %p80
      %p82 = scmp.ne.s32.totalorder %s71, %s72
      %p83 = scmp.eq.s32.totalorder %s16, 0
      %p84 = por %p82, %p83
      %p85 = scmp.ne.s32.totalorder %s71, %s72
      %p86 = scmp.eq.s32.totalorder %s17, 3
      %p87 = por %p85, %p86
      %p89 = scmp.ne.s32.totalorder %s72, %s88
      %p90 = scmp.eq.s32.totalorder %s17, 0
      %p91 = por %p89, %p90
      %s92 = ssub.s32 %s18, %s37
      %p93 = scmp.eq.s32.totalorder %s92, 0
      %s95 = sadd.s32 %s94, 1
      %s96 = scalar_select %p93, %s94, %s95
      %p99 = pneg %p93
      %p100 = scmp.eq.s32.totalorder %s11, 3
      %p101 = por %p99, %p100
      %p102 = scmp.ne.s32.totalorder %s94, %s97
      %p103 = scmp.eq.s32.totalorder %s11, 0
      %p104 = por %p102, %p103
      %p105 = scmp.ne.s32.totalorder %s94, %s97
      %p106 = scmp.eq.s32.totalorder %s16, 3
      %p107 = por %p105, %p106
      %p108 = scmp.ne.s32.totalorder %s97, %s98
      %p109 = scmp.eq.s32.totalorder %s16, 0
      %p110 = por %p108, %p109
      %p111 = scmp.ne.s32.totalorder %s97, %s98
      %p112 = scmp.eq.s32.totalorder %s17, 3
      %p113 = por %p111, %p112
      %p115 = scmp.ne.s32.totalorder %s98, %s114
      %p116 = scmp.eq.s32.totalorder %s17, 0
      %p117 = por %p115, %p116
      %p118 = scmp.le.s32.totalorder 1, %s11
      %p119 = scmp.lt.s32.totalorder %s11, 5
      %p120 = pnand %p118, %p119
      %p121 = pneg %p120
      // Predicated region
      $region9: #{tpu_custom_call.1} parent=5 // pred_check
        _
      $region10: #{tpu_custom_call.1} parent=5 // pred_check_branch
        %123 = sbr.rel (%p120) target = $region12
      $region11: #{tpu_custom_call.1} parent=5 // pred_region
        %s124 = ssub.s32 %s11, 1
      $region12: #{tpu_custom_call.1} parent=5 // pred_fallthru
        _
      %p125 = scmp.lt.s32.totalorder %s11, 4
      // Predicated region
      $region13: #{tpu_custom_call.1} parent=5 // pred_check
        %p126 = pneg %p125
      $region14: #{tpu_custom_call.1} parent=5 // pred_check_branch
        %128 = sbr.rel (%p126) target = $region16
      $region15: #{tpu_custom_call.1} parent=5 // pred_region
        // Predicated region
        $region17: #{tpu_custom_call.1} parent=15 // pred_check
          %p129 = pneg %p50
        $region18: #{tpu_custom_call.1} parent=15 // pred_check_branch
          %131 = sbr.rel (%p129) target = $region20
        $region19: #{tpu_custom_call.1} parent=15 // pred_region
          %p132 = scmp.lt.s32.totalorder %s18, 1
          %s133 = scalar_select %p132, %s18, 1
          %s134 = smul.addr %s133, 2
          %s135 = smul.addr %s134, 8
          %s136 = scalar_lea.vmem %s0, %s135
        $region20: #{tpu_custom_call.1} parent=15 // pred_fallthru
          _
        // Predicated region
        $region21: #{tpu_custom_call.1} parent=15 // pred_check
          %p137 = pneg %p78
        $region22: #{tpu_custom_call.1} parent=15 // pred_check_branch
          %139 = sbr.rel (%p137) target = $region24
        $region23: #{tpu_custom_call.1} parent=15 // pred_region
          %s140 = smul.u32 16, %s20
          %p141 = scmp.lt.s32.totalorder %s18, 1
          %s142 = scalar_select %p141, %s18, 1
          %p143 = scmp.lt.s32.totalorder %s140, 15
          %s144 = scalar_select %p143, %s140, 15
          %s145 = smul.addr %s142, 16
          %s146 = sadd.s32 %s144, %s145
          %s147 = smul.addr %s146, 8
          %s148 = scalar_lea.vmem %s1, %s147
          %s149 = smul.u32 16, %s20
        $region24: #{tpu_custom_call.1} parent=15 // pred_fallthru
          _
      $region16: #{tpu_custom_call.1} parent=5 // pred_fallthru
        _
      %p150 = scmp.le.s32.totalorder 1, %s11
      %p151 = scmp.lt.s32.totalorder %s11, 5
      %p152 = pnand %p150, %p151
      %p153 = pneg %p152
      // Predicated region
      $region25: #{tpu_custom_call.1} parent=5 // pred_check
        _
      $region26: #{tpu_custom_call.1} parent=5 // pred_check_branch
        %155 = sbr.rel (%p152) target = $region28
      $region27: #{tpu_custom_call.1} parent=5 // pred_region
        %s156 = ssub.s32 %s11, 1
        %p157 = scmp.lt.s32.totalorder %s21, 1
        %s158 = scalar_select %p157, %s21, 1
        %s159 = smul.addr %s158, 2
        %s160 = smul.addr %s159, 8
        %s161 = scalar_lea.vmem %s0, %s160
        %p162 = pneg %p56
        %p163 = pneg %p53
        %s164 = smul.u32 16, %s23
        %p165 = scmp.lt.s32.totalorder %s21, 1
        %s166 = scalar_select %p165, %s21, 1
        %p167 = scmp.lt.s32.totalorder %s164, 15
        %s168 = scalar_select %p167, %s164, 15
        %s169 = smul.addr %s166, 16
        %s170 = sadd.s32 %s168, %s169
        %s171 = smul.addr %s170, 8
        %s172 = scalar_lea.vmem %s1, %s171
        %p173 = pneg %p84
        %p174 = pneg %p81
        %p175 = pneg %p110
        %p176 = pneg %p107
        %s177 = sand.u32 %s97, 1
        %s178 = scalar_lea.sflag [#allocation8], %s177
        %s179 = sand.u32 %s97, 1
        %s180 = smul.addr %s179, 8
        %s181 = scalar_lea.vmem [#allocation7], %s180
        %p182 = scmp.lt.s32.totalorder %s21, 1
        %s183 = scalar_select %p182, %s21, 1
        %s184 = smul.addr %s183, 2
        %s185 = smul.addr %s184, 8
        %s186 = scalar_lea.vmem %s0, %s185
        %s187 = smul.u32 16, %s23
        %p188 = scmp.lt.s32.totalorder %s21, 1
        %s189 = scalar_select %p188, %s21, 1
        %p190 = scmp.lt.s32.totalorder %s187, 15
        %s191 = scalar_select %p190, %s187, 15
        %s192 = smul.addr %s189, 16
        %s193 = sadd.s32 %s191, %s192
        %s194 = smul.addr %s193, 8
        %s195 = scalar_lea.vmem %s1, %s194
        %s196 = smul.u32 16, %s23
        %s197 = smul.u32 %s23, 128
        %p198 = scmp.eq.s32.totalorder %s22, 0
        %p199 = scmp.eq.s32.totalorder %s23, 0
        %p200 = pnand %p198, %p199
        %p201 = pneg %p200
        // Predicated region
        $region29: #{tpu_custom_call.1} parent=27 // pred_check
          _
        $region30: #{tpu_custom_call.1} parent=27 // pred_check_branch
          %203 = sbr.rel (%p200) target = $region32
        $region31: #{tpu_custom_call.1} parent=27 // pred_region
          %v204 = vlaneseq
          %vm205 = vcmp.ge.s32.totalorder %v204, 0
          %vm206 = vcmp.lt.s32.totalorder %v204, 256
          %vm207 = vmand %vm205, %vm206
          %208 = vst.msk [vmem:[#allocation2] sm:$0x3] %vm207, inf
          %209 = vst.msk [vmem:[#allocation3] sm:$0x3] %vm207, 0.0
          %210 = vst.msk [vmem:[#allocation4] sm:$0x3] %vm207, 0.0
          %211 = vst.msk [vmem:[#allocation5] sm:$0x3] %vm207, 0.0
          %vm212 = vcmask 0
          %213 = vst.msk [vmem:[#allocation6] sm:$0x1] %vm212, 0.0
        $region32: #{tpu_custom_call.1} parent=27 // pred_fallthru
          _
        // Predicated region
        $region33: #{tpu_custom_call.1} parent=27 // pred_check
          %p214 = pneg %p198
        $region34: #{tpu_custom_call.1} parent=27 // pred_check_branch
          %216 = sbr.rel (%p214) target = $region36
        $region35: #{tpu_custom_call.1} parent=27 // pred_region
          %v217 = vld [vmem:[%s195] sm:$0xff]
          %v218 = vld [vmem:[%s195 + $0x8] sm:$0xff]
          %v219 = vld [vmem:[%s195 + $0x10] sm:$0xff]
          %v220 = vld [vmem:[%s195 + $0x18] sm:$0xff]
          %v221 = vld [vmem:[%s195 + $0x20] sm:$0xff]
          %v222 = vld [vmem:[%s195 + $0x28] sm:$0xff]
          %v223 = vld [vmem:[%s195 + $0x30] sm:$0xff]
          %v224 = vld [vmem:[%s195 + $0x38] sm:$0xff]
          %v225 = vld [vmem:[%s195 + $0x40] sm:$0xff]
          %v226 = vld [vmem:[%s195 + $0x48] sm:$0xff]
          %v227 = vld [vmem:[%s195 + $0x50] sm:$0xff]
          %v228 = vld [vmem:[%s195 + $0x58] sm:$0xff]
          %v229 = vld [vmem:[%s195 + $0x60] sm:$0xff]
          %v230 = vld [vmem:[%s195 + $0x68] sm:$0xff]
          %v231 = vld [vmem:[%s195 + $0x70] sm:$0xff]
          %v232 = vld [vmem:[%s195 + $0x78] sm:$0xff]
          %v233 = vld [vmem:[%s186] sm:$0xff]
          %v234 = vld [vmem:[%s186 + $0x8] sm:$0xff]
          %vm235 = vcmask 64512
          %v237 = vsel %vm235, %v217, 0
          %v240 = vsel %vm235, %v218, 0
          %v243 = vsel %vm235, %v219, 0
          %v246 = vsel %vm235, %v220, 0
          %v249 = vsel %vm235, %v221, 0
          %v252 = vsel %vm235, %v222, 0
          %v255 = vsel %vm235, %v223, 0
          %v258 = vsel %vm235, %v224, 0
          %v261 = vsel %vm235, %v225, 0
          %v264 = vsel %vm235, %v226, 0
          %v267 = vsel %vm235, %v227, 0
          %v270 = vsel %vm235, %v228, 0
          %v273 = vsel %vm235, %v229, 0
          %v276 = vsel %vm235, %v230, 0
          %v279 = vsel %vm235, %v231, 0
          %v282 = vsel %vm235, %v232, 0
          %284 = vmatprep.subr.mxu0 %v234
          %285 = vmatpush1.msra.mxu0 %v233
          %286 = vmatprep.subr.mxu0 0.0
          %287 = vmatpush1.msra.mxu0 0.0
          %288 = vmatprep.subr.mxu0 0.0
          %289 = vmatpush1.msra.mxu0 0.0
          %290 = vmatprep.subr.mxu0 0.0
          %291 = vmatpush1.msra.mxu0 0.0
          %292 = vmatprep.subr.mxu0 0.0
          %293 = vmatpush1.msra.mxu0 0.0
          %294 = vmatprep.subr.mxu0 0.0
          %295 = vmatpush1.msra.mxu0 0.0
          %296 = vmatprep.subr.mxu0 0.0
          %297 = vmatpush1.msra.mxu0 0.0
          %298 = vmatprep.subr.mxu0 0.0
          %299 = vmatpush1.msra.mxu0 0.0
          %300 = vmatprep.subr.mxu0 0.0
          %301 = vmatpush1.msra.mxu0 0.0
          %302 = vmatprep.subr.mxu0 0.0
          %303 = vmatpush1.msra.mxu0 0.0
          %304 = vmatprep.subr.mxu0 0.0
          %305 = vmatpush1.msra.mxu0 0.0
          %306 = vmatprep.subr.mxu0 0.0
          %307 = vmatpush1.msra.mxu0 0.0
          %308 = vmatprep.subr.mxu0 0.0
          %309 = vmatpush1.msra.mxu0 0.0
          %310 = vmatprep.subr.mxu0 0.0
          %311 = vmatpush1.msra.mxu0 0.0
          %312 = vmatprep.subr.mxu0 0.0
          %313 = vmatpush1.msra.mxu0 0.0
          %314 = vmatprep.subr.mxu0 0.0
          %315 = vmatpush1.msra.mxu0 0.0
          %316 = vmatprep.subr.mxu0 0.0
          %317 = vmatpush1.msra.mxu0 0.0
          %318 = vmatprep.subr.mxu0 0.0
          %319 = vmatpush1.msra.mxu0 0.0
          %320 = vmatprep.subr.mxu0 0.0
          %321 = vmatpush1.msra.mxu0 0.0
          %322 = vmatprep.subr.mxu0 0.0
          %323 = vmatpush1.msra.mxu0 0.0
          %324 = vmatprep.subr.mxu0 0.0
          %325 = vmatpush1.msra.mxu0 0.0
          %326 = vmatprep.subr.mxu0 0.0
          %327 = vmatpush1.msra.mxu0 0.0
          %328 = vmatprep.subr.mxu0 0.0
          %329 = vmatpush1.msra.mxu0 0.0
          %330 = vmatprep.subr.mxu0 0.0
          %331 = vmatpush1.msra.mxu0 0.0
          %332 = vmatprep.subr.mxu0 0.0
          %333 = vmatpush1.msra.mxu0 0.0
          %334 = vmatprep.subr.mxu0 0.0
          %335 = vmatpush1.msra.mxu0 0.0
          %336 = vmatprep.subr.mxu0 0.0
          %337 = vmatpush1.msra.mxu0 0.0
          %338 = vmatprep.subr.mxu0 0.0
          %339 = vmatpush1.msra.mxu0 0.0
          %340 = vmatprep.subr.mxu0 0.0
          %341 = vmatpush1.msra.mxu0 0.0
          %342 = vmatprep.subr.mxu0 0.0
          %343 = vmatpush1.msra.mxu0 0.0
          %344 = vmatprep.subr.mxu0 0.0
          %345 = vmatpush1.msra.mxu0 0.0
          %346 = vmatprep.subr.mxu0 0.0
          %347 = vmatpush1.msra.mxu0 0.0
          %348 = vmatprep.mubr.f32.mxu0 0.0
          %349 = vmatmul.mubr.f32.gmra.mrb[0].mxu0 %v237
          %v350 = vpop.f32.mrb[0].mxu0
          %v351 = vadd.f32 0.0, %v350
          %v352 = vpop.f32.mrb[0].mxu0
          %v353 = vadd.f32 0.0, %v352
          %354 = vmatprep.mubr.f32.mxu0 0.0
          %355 = vmatmul.mubr.f32.gmra.mrb[0].mxu0 %v240
          %v356 = vpop.f32.mrb[0].mxu0
          %v357 = vadd.f32 0.0, %v356
          %v358 = vpop.f32.mrb[0].mxu0
          %v359 = vadd.f32 0.0, %v358
          %360 = vmatprep.mubr.f32.mxu0 0.0
          %361 = vmatmul.mubr.f32.gmra.mrb[0].mxu0 %v243
          %v362 = vpop.f32.mrb[0].mxu0
          %v363 = vadd.f32 0.0, %v362
          %v364 = vpop.f32.mrb[0].mxu0
          %v365 = vadd.f32 0.0, %v364
          %366 = vmatprep.mubr.f32.mxu0 0.0
          %367 = vmatmul.mubr.f32.gmra.mrb[0].mxu0 %v246
          %v368 = vpop.f32.mrb[0].mxu0
          %v369 = vadd.f32 0.0, %v368
          %v370 = vpop.f32.mrb[0].mxu0
          %v371 = vadd.f32 0.0, %v370
          %372 = vmatprep.mubr.f32.mxu0 0.0
          %373 = vmatmul.mubr.f32.gmra.mrb[0].mxu0 %v249
          %v374 = vpop.f32.mrb[0].mxu0
          %v375 = vadd.f32 0.0, %v374
          %v376 = vpop.f32.mrb[0].mxu0
          %v377 = vadd.f32 0.0, %v376
          %378 = vmatprep.mubr.f32.mxu0 0.0
          %379 = vmatmul.mubr.f32.gmra.mrb[0].mxu0 %v252
          %v380 = vpop.f32.mrb[0].mxu0
          %v381 = vadd.f32 0.0, %v380
          %v382 = vpop.f32.mrb[0].mxu0
          %v383 = vadd.f32 0.0, %v382
          %384 = vmatprep.mubr.f32.mxu0 0.0
          %385 = vmatmul.mubr.f32.gmra.mrb[0].mxu0 %v255
          %v386 = vpop.f32.mrb[0].mxu0
          %v387 = vadd.f32 0.0, %v386
          %v388 = vpop.f32.mrb[0].mxu0
          %v389 = vadd.f32 0.0, %v388
          %390 = vmatprep.mubr.f32.mxu0 0.0
          %391 = vmatmul.mubr.f32.gmra.mrb[0].mxu0 %v258
          %v392 = vpop.f32.mrb[0].mxu0
          %v393 = vadd.f32 0.0, %v392
          %v394 = vpop.f32.mrb[0].mxu0
          %v395 = vadd.f32 0.0, %v394
          %396 = vmatprep.mubr.f32.mxu0 0.0
          %397 = vmatmul.mubr.f32.gmra.mrb[0].mxu0 %v261
          %v398 = vpop.f32.mrb[0].mxu0
          %v399 = vadd.f32 0.0, %v398
          %v400 = vpop.f32.mrb[0].mxu0
          %v401 = vadd.f32 0.0, %v400
          %402 = vmatprep.mubr.f32.mxu0 0.0
          %403 = vmatmul.mubr.f32.gmra.mrb[0].mxu0 %v264
          %v404 = vpop.f32.mrb[0].mxu0
          %v405 = vadd.f32 0.0, %v404
          %v406 = vpop.f32.mrb[0].mxu0
          %v407 = vadd.f32 0.0, %v406
          %408 = vmatprep.mubr.f32.mxu0 0.0
          %409 = vmatmul.mubr.f32.gmra.mrb[0].mxu0 %v267
          %v410 = vpop.f32.mrb[0].mxu0
          %v411 = vadd.f32 0.0, %v410
          %v412 = vpop.f32.mrb[0].mxu0
          %v413 = vadd.f32 0.0, %v412
          %414 = vmatprep.mubr.f32.mxu0 0.0
          %415 = vmatmul.mubr.f32.gmra.mrb[0].mxu0 %v270
          %v416 = vpop.f32.mrb[0].mxu0
          %v417 = vadd.f32 0.0, %v416
          %v418 = vpop.f32.mrb[0].mxu0
          %v419 = vadd.f32 0.0, %v418
          %420 = vmatprep.mubr.f32.mxu0 0.0
          %421 = vmatmul.mubr.f32.gmra.mrb[0].mxu0 %v273
          %v422 = vpop.f32.mrb[0].mxu0
          %v423 = vadd.f32 0.0, %v422
          %v424 = vpop.f32.mrb[0].mxu0
          %v425 = vadd.f32 0.0, %v424
          %426 = vmatprep.mubr.f32.mxu0 0.0
          %427 = vmatmul.mubr.f32.gmra.mrb[0].mxu0 %v276
          %v428 = vpop.f32.mrb[0].mxu0
          %v429 = vadd.f32 0.0, %v428
          %v430 = vpop.f32.mrb[0].mxu0
          %v431 = vadd.f32 0.0, %v430
          %432 = vmatprep.mubr.f32.mxu0 0.0
          %433 = vmatmul.mubr.f32.gmra.mrb[0].mxu0 %v279
          %v434 = vpop.f32.mrb[0].mxu0
          %v435 = vadd.f32 0.0, %v434
          %v436 = vpop.f32.mrb[0].mxu0
          %v437 = vadd.f32 0.0, %v436
          %438 = vmatprep.mubr.f32.mxu0 0.0
          %439 = vmatmul.mubr.f32.gmra.mrb[0].mxu0 %v282
          %v440 = vpop.f32.mrb[0].mxu0
          %v441 = vadd.f32 0.0, %v440
          %v442 = vpop.f32.mrb[0].mxu0
          %v443 = vadd.f32 0.0, %v442
          %444 = vdwg.mxu0
          %v445 = vlaneseq
          %v446 = vshrl.u32 %v445, 7
          %v447 = vadd.s32 %v446, 8
          %v448 = vadd.s32 %v446, 16
          %v449 = vadd.s32 %v446, 24
          %v450 = vadd.s32 %v446, 32
          %v451 = vadd.s32 %v446, 40
          %v452 = vadd.s32 %v446, 48
          %v453 = vadd.s32 %v446, 56
          %v454 = vadd.s32 %v446, 64
          %v455 = vadd.s32 %v446, 72
          %v456 = vadd.s32 %v446, 80
          %v457 = vadd.s32 %v446, 88
          %v458 = vadd.s32 %v446, 96
          %v459 = vadd.s32 %v446, 104
          %v460 = vadd.s32 %v446, 112
          %v461 = vadd.s32 %v446, 120
          %v462 = vstv %s197
          %v463 = vadd.s32 %v462, %v446
          %v464 = vadd.s32 %v462, %v447
          %v465 = vadd.s32 %v462, %v448
          %v466 = vadd.s32 %v462, %v449
          %v467 = vadd.s32 %v462, %v450
          %v468 = vadd.s32 %v462, %v451
          %v469 = vadd.s32 %v462, %v452
          %v470 = vadd.s32 %v462, %v453
          %v471 = vadd.s32 %v462, %v454
          %v472 = vadd.s32 %v462, %v455
          %v473 = vadd.s32 %v462, %v456
          %v474 = vadd.s32 %v462, %v457
          %v475 = vadd.s32 %v462, %v458
          %v476 = vadd.s32 %v462, %v459
          %v477 = vadd.s32 %v462, %v460
          %v478 = vadd.s32 %v462, %v461
          %v479 = vcvt.s32.f32 %v463
          %v480 = vcvt.s32.f32 %v464
          %v481 = vcvt.s32.f32 %v465
          %v482 = vcvt.s32.f32 %v466
          %v483 = vcvt.s32.f32 %v467
          %v484 = vcvt.s32.f32 %v468
          %v485 = vcvt.s32.f32 %v469
          %v486 = vcvt.s32.f32 %v470
          %v487 = vcvt.s32.f32 %v471
          %v488 = vcvt.s32.f32 %v472
          %v489 = vcvt.s32.f32 %v473
          %v490 = vcvt.s32.f32 %v474
          %v491 = vcvt.s32.f32 %v475
          %v492 = vcvt.s32.f32 %v476
          %v493 = vcvt.s32.f32 %v477
          %v494 = vcvt.s32.f32 %v478
          %v495 = vlaneseq
          %v496 = vand.u32 %v495, 127
          %v497 = vadd.s32 %v496, 128
          %v498 = vcvt.s32.f32 %v496
          %v499 = vcvt.s32.f32 %v497
          %v500 = vmin.f32 %v351, %v363
          %v501 = vmin.f32 %v357, %v369
          %v502 = vmin.f32 %v500, %v375
          %v503 = vmin.f32 %v501, %v381
          %v504 = vmin.f32 %v502, %v387
          %v505 = vmin.f32 %v503, %v393
          %v506 = vmin.f32 %v504, %v399
          %v507 = vmin.f32 %v505, %v405
          %v508 = vmin.f32 %v506, %v411
          %v509 = vmin.f32 %v507, %v417
          %v510 = vmin.f32 %v508, %v423
          %v511 = vmin.f32 %v509, %v429
          %v512 = vmin.f32 %v510, %v435
          %v513 = vmin.f32 %v511, %v441
          %v514 = vmin.f32 %v512, %v513
          %v515 = vrot.slane %v514, 4
          %v516 = vmin.f32 %v514, %v515
          %v517 = vrot.slane %v516, 2
          %v518 = vmin.f32 %v516, %v517
          %v519 = vrot.slane %v518, 1
          %v520 = vmin.f32 %v518, %v519
          %v521 = vmin.f32 %v353, %v365
          %v522 = vmin.f32 %v359, %v371
          %v523 = vmin.f32 %v521, %v377
          %v524 = vmin.f32 %v522, %v383
          %v525 = vmin.f32 %v523, %v389
          %v526 = vmin.f32 %v524, %v395
          %v527 = vmin.f32 %v525, %v401
          %v528 = vmin.f32 %v526, %v407
          %v529 = vmin.f32 %v527, %v413
          %v530 = vmin.f32 %v528, %v419
          %v531 = vmin.f32 %v529, %v425
          %v532 = vmin.f32 %v530, %v431
          %v533 = vmin.f32 %v531, %v437
          %v534 = vmin.f32 %v532, %v443
          %v535 = vmin.f32 %v533, %v534
          %v536 = vrot.slane %v535, 4
          %v537 = vmin.f32 %v535, %v536
          %v538 = vrot.slane %v537, 2
          %v539 = vmin.f32 %v537, %v538
          %v540 = vrot.slane %v539, 1
          %v541 = vmin.f32 %v539, %v540
          %vm542 = vcmp.eq.f32.partialorder %v351, %v520
          %vm543 = vcmp.eq.f32.partialorder %v353, %v541
          %vm544 = vcmp.eq.f32.partialorder %v357, %v520
          %vm545 = vcmp.eq.f32.partialorder %v359, %v541
          %vm546 = vcmp.eq.f32.partialorder %v363, %v520
          %vm547 = vcmp.eq.f32.partialorder %v365, %v541
          %vm548 = vcmp.eq.f32.partialorder %v369, %v520
          %vm549 = vcmp.eq.f32.partialorder %v371, %v541
          %vm550 = vcmp.eq.f32.partialorder %v375, %v520
          %vm551 = vcmp.eq.f32.partialorder %v377, %v541
          %vm552 = vcmp.eq.f32.partialorder %v381, %v520
          %vm553 = vcmp.eq.f32.partialorder %v383, %v541
          %vm554 = vcmp.eq.f32.partialorder %v387, %v520
          %vm555 = vcmp.eq.f32.partialorder %v389, %v541
          %vm556 = vcmp.eq.f32.partialorder %v393, %v520
          %vm557 = vcmp.eq.f32.partialorder %v395, %v541
          %vm558 = vcmp.eq.f32.partialorder %v399, %v520
          %vm559 = vcmp.eq.f32.partialorder %v401, %v541
          %vm560 = vcmp.eq.f32.partialorder %v405, %v520
          %vm561 = vcmp.eq.f32.partialorder %v407, %v541
          %vm562 = vcmp.eq.f32.partialorder %v411, %v520
          %vm563 = vcmp.eq.f32.partialorder %v413, %v541
          %vm564 = vcmp.eq.f32.partialorder %v417, %v520
          %vm565 = vcmp.eq.f32.partialorder %v419, %v541
          %vm566 = vcmp.eq.f32.partialorder %v423, %v520
          %vm567 = vcmp.eq.f32.partialorder %v425, %v541
          %vm568 = vcmp.eq.f32.partialorder %v429, %v520
          %vm569 = vcmp.eq.f32.partialorder %v431, %v541
          %vm570 = vcmp.eq.f32.partialorder %v435, %v520
          %vm571 = vcmp.eq.f32.partialorder %v437, %v541
          %vm572 = vcmp.eq.f32.partialorder %v441, %v520
          %vm573 = vcmp.eq.f32.partialorder %v443, %v541
          %v574 = vsel %vm542, %v479, 128.0
          %v575 = vsel %vm543, %v479, 128.0
          %v576 = vsel %vm544, %v480, 128.0
          %v577 = vsel %vm545, %v480, 128.0
          %v578 = vsel %vm546, %v481, 128.0
          %v579 = vsel %vm547, %v481, 128.0
          %v580 = vsel %vm548, %v482, 128.0
          %v581 = vsel %vm549, %v482, 128.0
          %v582 = vsel %vm550, %v483, 128.0
          %v583 = vsel %vm551, %v483, 128.0
          %v584 = vsel %vm552, %v484, 128.0
          %v585 = vsel %vm553, %v484, 128.0
          %v586 = vsel %vm554, %v485, 128.0
          %v587 = vsel %vm555, %v485, 128.0
          %v588 = vsel %vm556, %v486, 128.0
          %v589 = vsel %vm557, %v486, 128.0
          %v590 = vsel %vm558, %v487, 128.0
          %v591 = vsel %vm559, %v487, 128.0
          %v592 = vsel %vm560, %v488, 128.0
          %v593 = vsel %vm561, %v488, 128.0
          %v594 = vsel %vm562, %v489, 128.0
          %v595 = vsel %vm563, %v489, 128.0
          %v596 = vsel %vm564, %v490, 128.0
          %v597 = vsel %vm565, %v490, 128.0
          %v598 = vsel %vm566, %v491, 128.0
          %v599 = vsel %vm567, %v491, 128.0
          %v600 = vsel %vm568, %v492, 128.0
          %v601 = vsel %vm569, %v492, 128.0
          %v602 = vsel %vm570, %v493, 128.0
          %v603 = vsel %vm571, %v493, 128.0
          %v604 = vsel %vm572, %v494, 128.0
          %v605 = vsel %vm573, %v494, 128.0
          %v606 = vmin.f32 %v574, %v578
          %v607 = vmin.f32 %v576, %v580
          %v608 = vmin.f32 %v606, %v582
          %v609 = vmin.f32 %v607, %v584
          %v610 = vmin.f32 %v608, %v586
          %v611 = vmin.f32 %v609, %v588
          %v612 = vmin.f32 %v610, %v590
          %v613 = vmin.f32 %v611, %v592
          %v614 = vmin.f32 %v612, %v594
          %v615 = vmin.f32 %v613, %v596
          %v616 = vmin.f32 %v614, %v598
          %v617 = vmin.f32 %v615, %v600
          %v618 = vmin.f32 %v616, %v602
          %v619 = vmin.f32 %v617, %v604
          %v620 = vmin.f32 %v618, %v619
          %v621 = vrot.slane %v620, 4
          %v622 = vmin.f32 %v620, %v621
          %v623 = vrot.slane %v622, 2
          %v624 = vmin.f32 %v622, %v623
          %v625 = vrot.slane %v624, 1
          %v626 = vmin.f32 %v624, %v625
          %v627 = vmin.f32 %v575, %v579
          %v628 = vmin.f32 %v577, %v581
          %v629 = vmin.f32 %v627, %v583
          %v630 = vmin.f32 %v628, %v585
          %v631 = vmin.f32 %v629, %v587
          %v632 = vmin.f32 %v630, %v589
          %v633 = vmin.f32 %v631, %v591
          %v634 = vmin.f32 %v632, %v593
          %v635 = vmin.f32 %v633, %v595
          %v636 = vmin.f32 %v634, %v597
          %v637 = vmin.f32 %v635, %v599
          %v638 = vmin.f32 %v636, %v601
          %v639 = vmin.f32 %v637, %v603
          %v640 = vmin.f32 %v638, %v605
          %v641 = vmin.f32 %v639, %v640
          %v642 = vrot.slane %v641, 4
          %v643 = vmin.f32 %v641, %v642
          %v644 = vrot.slane %v643, 2
          %v645 = vmin.f32 %v643, %v644
          %v646 = vrot.slane %v645, 1
          %v647 = vmin.f32 %v645, %v646
          %v648 = vld [vmem:[#allocation2] sm:$0x3]
          %v650 = vlaneseq
          %v651 = vshrl.u32 %v650, 7
          %v652 = vsub.s32 0, %v651
          %v653 = vrot.slane %v648, %v652
          %v654 = vlaneseq
          %v655 = vshrl.u32 %v654, 7
          %v656 = vsub.s32 1, %v655
          %v657 = vrot.slane %v648, %v656
          %vm660 = vcmp.lt.f32.partialorder %v520, %v653
          %vm661 = vcmp.lt.f32.partialorder %v541, %v657
          %v662 = vsel %vm660, %v520, %v653
          %v663 = vsel %vm661, %v541, %v657
          %v666 = vcombine.low %v662, %v663
          %v668 = vunpack.c.l.s4 1966171168
          %v669 = vunpack.c.0.s8 %v668
          %v670 = vlaneseq
          %v671 = vshrl.u32 %v670, 7
          %v672 = vsub.s32 %v669, %v671
          %v673 = vrot.slane %v666, %v672
          %v675 = vunpack.c.l.s4 1966171168
          %v676 = vunpack.c.0.s8 %v675
          %v677 = vlaneseq
          %v678 = vshrl.u32 %v677, 7
          %v679 = vsub.s32 %v676, %v678
          %v680 = vrot.slane %v673, %v679
          %v682 = vlaneseq
          %vm683 = vcmp.ge.s32.totalorder %v682, 0
          %vm684 = vcmp.lt.s32.totalorder %v682, 256
          %vm685 = vmand %vm683, %vm684
          %686 = vst.msk [vmem:[#allocation2] sm:$0x3] %vm685, %v680
          %v687 = vld [vmem:[#allocation3] sm:$0x3]
          %v689 = vlaneseq
          %v690 = vshrl.u32 %v689, 7
          %v691 = vsub.s32 0, %v690
          %v692 = vrot.slane %v687, %v691
          %v693 = vlaneseq
          %v694 = vshrl.u32 %v693, 7
          %v695 = vsub.s32 1, %v694
          %v696 = vrot.slane %v687, %v695
          %v699 = vsel %vm660, %v626, %v692
          %v700 = vsel %vm661, %v647, %v696
          %v703 = vcombine.low %v699, %v700
          %v705 = vunpack.c.l.s4 1966171168
          %v706 = vunpack.c.0.s8 %v705
          %v707 = vlaneseq
          %v708 = vshrl.u32 %v707, 7
          %v709 = vsub.s32 %v706, %v708
          %v710 = vrot.slane %v703, %v709
          %v712 = vunpack.c.l.s4 1966171168
          %v713 = vunpack.c.0.s8 %v712
          %v714 = vlaneseq
          %v715 = vshrl.u32 %v714, 7
          %v716 = vsub.s32 %v713, %v715
          %v717 = vrot.slane %v710, %v716
          %719 = vst.msk [vmem:[#allocation3] sm:$0x3] %vm685, %v717
          %v720 = vmin.f32 %v351, %v353
          %721 = vmin.xlane.f32.xlu0 %v720
          %v722 = vpop.xlane.xlu0 %721
          %v723 = vmin.f32 %v357, %v359
          %724 = vmin.xlane.f32.xlu0 %v723
          %v725 = vpop.xlane.xlu0 %724
          %v726 = vmin.f32 %v363, %v365
          %727 = vmin.xlane.f32.xlu0 %v726
          %v728 = vpop.xlane.xlu0 %727
          %v729 = vmin.f32 %v369, %v371
          %730 = vmin.xlane.f32.xlu0 %v729
          %v731 = vpop.xlane.xlu0 %730
          %v732 = vmin.f32 %v375, %v377
          %733 = vmin.xlane.f32.xlu0 %v732
          %v734 = vpop.xlane.xlu0 %733
          %v735 = vmin.f32 %v381, %v383
          %736 = vmin.xlane.f32.xlu0 %v735
          %v737 = vpop.xlane.xlu0 %736
          %v738 = vmin.f32 %v387, %v389
          %739 = vmin.xlane.f32.xlu0 %v738
          %v740 = vpop.xlane.xlu0 %739
          %v741 = vmin.f32 %v393, %v395
          %742 = vmin.xlane.f32.xlu0 %v741
          %v743 = vpop.xlane.xlu0 %742
          %v744 = vmin.f32 %v399, %v401
          %745 = vmin.xlane.f32.xlu0 %v744
          %v746 = vpop.xlane.xlu0 %745
          %v747 = vmin.f32 %v405, %v407
          %748 = vmin.xlane.f32.xlu0 %v747
          %v749 = vpop.xlane.xlu0 %748
          %v750 = vmin.f32 %v411, %v413
          %751 = vmin.xlane.f32.xlu0 %v750
          %v752 = vpop.xlane.xlu0 %751
          %v753 = vmin.f32 %v417, %v419
          %754 = vmin.xlane.f32.xlu0 %v753
          %v755 = vpop.xlane.xlu0 %754
          %v756 = vmin.f32 %v423, %v425
          %757 = vmin.xlane.f32.xlu0 %v756
          %v758 = vpop.xlane.xlu0 %757
          %v759 = vmin.f32 %v429, %v431
          %760 = vmin.xlane.f32.xlu0 %v759
          %v761 = vpop.xlane.xlu0 %760
          %v762 = vmin.f32 %v435, %v437
          %763 = vmin.xlane.f32.xlu0 %v762
          %v764 = vpop.xlane.xlu0 %763
          %v765 = vmin.f32 %v441, %v443
          %766 = vmin.xlane.f32.xlu0 %v765
          %v767 = vpop.xlane.xlu0 %766
          %vm768 = vcmp.eq.f32.partialorder %v351, %v722
          %vm769 = vcmp.eq.f32.partialorder %v353, %v722
          %vm770 = vcmp.eq.f32.partialorder %v357, %v725
          %vm771 = vcmp.eq.f32.partialorder %v359, %v725
          %vm772 = vcmp.eq.f32.partialorder %v363, %v728
          %vm773 = vcmp.eq.f32.partialorder %v365, %v728
          %vm774 = vcmp.eq.f32.partialorder %v369, %v731
          %vm775 = vcmp.eq.f32.partialorder %v371, %v731
          %vm776 = vcmp.eq.f32.partialorder %v375, %v734
          %vm777 = vcmp.eq.f32.partialorder %v377, %v734
          %vm778 = vcmp.eq.f32.partialorder %v381, %v737
          %vm779 = vcmp.eq.f32.partialorder %v383, %v737
          %vm780 = vcmp.eq.f32.partialorder %v387, %v740
          %vm781 = vcmp.eq.f32.partialorder %v389, %v740
          %vm782 = vcmp.eq.f32.partialorder %v393, %v743
          %vm783 = vcmp.eq.f32.partialorder %v395, %v743
          %vm784 = vcmp.eq.f32.partialorder %v399, %v746
          %vm785 = vcmp.eq.f32.partialorder %v401, %v746
          %vm786 = vcmp.eq.f32.partialorder %v405, %v749
          %vm787 = vcmp.eq.f32.partialorder %v407, %v749
          %vm788 = vcmp.eq.f32.partialorder %v411, %v752
          %vm789 = vcmp.eq.f32.partialorder %v413, %v752
          %vm790 = vcmp.eq.f32.partialorder %v417, %v755
          %vm791 = vcmp.eq.f32.partialorder %v419, %v755
          %vm792 = vcmp.eq.f32.partialorder %v423, %v758
          %vm793 = vcmp.eq.f32.partialorder %v425, %v758
          %vm794 = vcmp.eq.f32.partialorder %v429, %v761
          %vm795 = vcmp.eq.f32.partialorder %v431, %v761
          %vm796 = vcmp.eq.f32.partialorder %v435, %v764
          %vm797 = vcmp.eq.f32.partialorder %v437, %v764
          %vm798 = vcmp.eq.f32.partialorder %v441, %v767
          %vm799 = vcmp.eq.f32.partialorder %v443, %v767
          %v800 = vsel %vm768, %v498, 256.0
          %v801 = vsel %vm769, %v499, 256.0
          %v802 = vsel %vm770, %v498, 256.0
          %v803 = vsel %vm771, %v499, 256.0
          %v804 = vsel %vm772, %v498, 256.0
          %v805 = vsel %vm773, %v499, 256.0
          %v806 = vsel %vm774, %v498, 256.0
          %v807 = vsel %vm775, %v499, 256.0
          %v808 = vsel %vm776, %v498, 256.0
          %v809 = vsel %vm777, %v499, 256.0
          %v810 = vsel %vm778, %v498, 256.0
          %v811 = vsel %vm779, %v499, 256.0
          %v812 = vsel %vm780, %v498, 256.0
          %v813 = vsel %vm781, %v499, 256.0
          %v814 = vsel %vm782, %v498, 256.0
          %v815 = vsel %vm783, %v499, 256.0
          %v816 = vsel %vm784, %v498, 256.0
          %v817 = vsel %vm785, %v499, 256.0
          %v818 = vsel %vm786, %v498, 256.0
          %v819 = vsel %vm787, %v499, 256.0
          %v820 = vsel %vm788, %v498, 256.0
          %v821 = vsel %vm789, %v499, 256.0
          %v822 = vsel %vm790, %v498, 256.0
          %v823 = vsel %vm791, %v499, 256.0
          %v824 = vsel %vm792, %v498, 256.0
          %v825 = vsel %vm793, %v499, 256.0
          %v826 = vsel %vm794, %v498, 256.0
          %v827 = vsel %vm795, %v499, 256.0
          %v828 = vsel %vm796, %v498, 256.0
          %v829 = vsel %vm797, %v499, 256.0
          %v830 = vsel %vm798, %v498, 256.0
          %v831 = vsel %vm799, %v499, 256.0
          %v832 = vmin.f32 %v800, %v801
          %833 = vmin.xlane.f32.xlu0 %v832
          %v834 = vpop.xlane.xlu0 %833
          %v835 = vmin.f32 %v802, %v803
          %836 = vmin.xlane.f32.xlu0 %v835
          %v837 = vpop.xlane.xlu0 %836
          %v838 = vmin.f32 %v804, %v805
          %839 = vmin.xlane.f32.xlu0 %v838
          %v840 = vpop.xlane.xlu0 %839
          %v841 = vmin.f32 %v806, %v807
          %842 = vmin.xlane.f32.xlu0 %v841
          %v843 = vpop.xlane.xlu0 %842
          %v844 = vmin.f32 %v808, %v809
          %845 = vmin.xlane.f32.xlu0 %v844
          %v846 = vpop.xlane.xlu0 %845
          %v847 = vmin.f32 %v810, %v811
          %848 = vmin.xlane.f32.xlu0 %v847
          %v849 = vpop.xlane.xlu0 %848
          %v850 = vmin.f32 %v812, %v813
          %851 = vmin.xlane.f32.xlu0 %v850
          %v852 = vpop.xlane.xlu0 %851
          %v853 = vmin.f32 %v814, %v815
          %854 = vmin.xlane.f32.xlu0 %v853
          %v855 = vpop.xlane.xlu0 %854
          %v856 = vmin.f32 %v816, %v817
          %857 = vmin.xlane.f32.xlu0 %v856
          %v858 = vpop.xlane.xlu0 %857
          %v859 = vmin.f32 %v818, %v819
          %860 = vmin.xlane.f32.xlu0 %v859
          %v861 = vpop.xlane.xlu0 %860
          %v862 = vmin.f32 %v820, %v821
          %863 = vmin.xlane.f32.xlu0 %v862
          %v864 = vpop.xlane.xlu0 %863
          %v865 = vmin.f32 %v822, %v823
          %866 = vmin.xlane.f32.xlu0 %v865
          %v867 = vpop.xlane.xlu0 %866
          %v868 = vmin.f32 %v824, %v825
          %869 = vmin.xlane.f32.xlu0 %v868
          %v870 = vpop.xlane.xlu0 %869
          %v871 = vmin.f32 %v826, %v827
          %872 = vmin.xlane.f32.xlu0 %v871
          %v873 = vpop.xlane.xlu0 %872
          %v874 = vmin.f32 %v828, %v829
          %875 = vmin.xlane.f32.xlu0 %v874
          %v876 = vpop.xlane.xlu0 %875
          %v877 = vmin.f32 %v830, %v831
          %878 = vmin.xlane.f32.xlu0 %v877
          %v879 = vpop.xlane.xlu0 %878
          %v880 = vmax.f32 %v722, 0.0
          %v881 = vmax.f32 %v725, 0.0
          %v882 = vmax.f32 %v728, 0.0
          %v883 = vmax.f32 %v731, 0.0
          %v884 = vmax.f32 %v734, 0.0
          %v885 = vmax.f32 %v737, 0.0
          %v886 = vmax.f32 %v740, 0.0
          %v887 = vmax.f32 %v743, 0.0
          %v888 = vmax.f32 %v746, 0.0
          %v889 = vmax.f32 %v749, 0.0
          %v890 = vmax.f32 %v752, 0.0
          %v891 = vmax.f32 %v755, 0.0
          %v892 = vmax.f32 %v758, 0.0
          %v893 = vmax.f32 %v761, 0.0
          %v894 = vmax.f32 %v764, 0.0
          %v895 = vmax.f32 %v767, 0.0
          %v896 = vmul.f32 %v880, -50.0
          %v897 = vmul.f32 %v881, -50.0
          %v898 = vmul.f32 %v882, -50.0
          %v899 = vmul.f32 %v883, -50.0
          %v900 = vmul.f32 %v884, -50.0
          %v901 = vmul.f32 %v885, -50.0
          %v902 = vmul.f32 %v886, -50.0
          %v903 = vmul.f32 %v887, -50.0
          %v904 = vmul.f32 %v888, -50.0
          %v905 = vmul.f32 %v889, -50.0
          %v906 = vmul.f32 %v890, -50.0
          %v907 = vmul.f32 %v891, -50.0
          %v908 = vmul.f32 %v892, -50.0
          %v909 = vmul.f32 %v893, -50.0
          %v910 = vmul.f32 %v894, -50.0
          %v911 = vmul.f32 %v895, -50.0
          %v912 = vmul.f32 %v896, 1.442695
          %v913 = vpow.pop %v912
          %v914 = vmul.f32 %v897, 1.442695
          %v915 = vpow.pop %v914
          %v916 = vmul.f32 %v898, 1.442695
          %v917 = vpow.pop %v916
          %v918 = vmul.f32 %v899, 1.442695
          %v919 = vpow.pop %v918
          %v920 = vmul.f32 %v900, 1.442695
          %v921 = vpow.pop %v920
          %v922 = vmul.f32 %v901, 1.442695
          %v923 = vpow.pop %v922
          %v924 = vmul.f32 %v902, 1.442695
          %v925 = vpow.pop %v924
          %v926 = vmul.f32 %v903, 1.442695
          %v927 = vpow.pop %v926
          %v928 = vmul.f32 %v904, 1.442695
          %v929 = vpow.pop %v928
          %v930 = vmul.f32 %v905, 1.442695
          %v931 = vpow.pop %v930
          %v932 = vmul.f32 %v906, 1.442695
          %v933 = vpow.pop %v932
          %v934 = vmul.f32 %v907, 1.442695
          %v935 = vpow.pop %v934
          %v936 = vmul.f32 %v908, 1.442695
          %v937 = vpow.pop %v936
          %v938 = vmul.f32 %v909, 1.442695
          %v939 = vpow.pop %v938
          %v940 = vmul.f32 %v910, 1.442695
          %v941 = vpow.pop %v940
          %v942 = vmul.f32 %v911, 1.442695
          %v943 = vpow.pop %v942
          %vm944 = vcmp.eq.f32.partialorder %v498, %v834
          %vm945 = vcmp.eq.f32.partialorder %v499, %v834
          %vm946 = vcmp.eq.f32.partialorder %v498, %v837
          %vm947 = vcmp.eq.f32.partialorder %v499, %v837
          %vm948 = vcmp.eq.f32.partialorder %v498, %v840
          %vm949 = vcmp.eq.f32.partialorder %v499, %v840
          %vm950 = vcmp.eq.f32.partialorder %v498, %v843
          %vm951 = vcmp.eq.f32.partialorder %v499, %v843
          %vm952 = vcmp.eq.f32.partialorder %v498, %v846
          %vm953 = vcmp.eq.f32.partialorder %v499, %v846
          %vm954 = vcmp.eq.f32.partialorder %v498, %v849
          %vm955 = vcmp.eq.f32.partialorder %v499, %v849
          %vm956 = vcmp.eq.f32.partialorder %v498, %v852
          %vm957 = vcmp.eq.f32.partialorder %v499, %v852
          %vm958 = vcmp.eq.f32.partialorder %v498, %v855
          %vm959 = vcmp.eq.f32.partialorder %v499, %v855
          %vm960 = vcmp.eq.f32.partialorder %v498, %v858
          %vm961 = vcmp.eq.f32.partialorder %v499, %v858
          %vm962 = vcmp.eq.f32.partialorder %v498, %v861
          %vm963 = vcmp.eq.f32.partialorder %v499, %v861
          %vm964 = vcmp.eq.f32.partialorder %v498, %v864
          %vm965 = vcmp.eq.f32.partialorder %v499, %v864
          %vm966 = vcmp.eq.f32.partialorder %v498, %v867
          %vm967 = vcmp.eq.f32.partialorder %v499, %v867
          %vm968 = vcmp.eq.f32.partialorder %v498, %v870
          %vm969 = vcmp.eq.f32.partialorder %v499, %v870
          %vm970 = vcmp.eq.f32.partialorder %v498, %v873
          %vm971 = vcmp.eq.f32.partialorder %v499, %v873
          %vm972 = vcmp.eq.f32.partialorder %v498, %v876
          %vm973 = vcmp.eq.f32.partialorder %v499, %v876
          %vm974 = vcmp.eq.f32.partialorder %v498, %v879
          %vm975 = vcmp.eq.f32.partialorder %v499, %v879
          %v976 = vld [vmem:[#allocation4] sm:$0x3]
          %v977 = vsel %vm944, 1.0, 0.0
          %v978 = vsel %vm945, 1.0, 0.0
          %v979 = vsel %vm946, 1.0, 0.0
          %v980 = vsel %vm947, 1.0, 0.0
          %v981 = vsel %vm948, 1.0, 0.0
          %v982 = vsel %vm949, 1.0, 0.0
          %v983 = vsel %vm950, 1.0, 0.0
          %v984 = vsel %vm951, 1.0, 0.0
          %v985 = vsel %vm952, 1.0, 0.0
          %v986 = vsel %vm953, 1.0, 0.0
          %v987 = vsel %vm954, 1.0, 0.0
          %v988 = vsel %vm955, 1.0, 0.0
          %v989 = vsel %vm956, 1.0, 0.0
          %v990 = vsel %vm957, 1.0, 0.0
          %v991 = vsel %vm958, 1.0, 0.0
          %v992 = vsel %vm959, 1.0, 0.0
          %v993 = vsel %vm960, 1.0, 0.0
          %v994 = vsel %vm961, 1.0, 0.0
          %v995 = vsel %vm962, 1.0, 0.0
          %v996 = vsel %vm963, 1.0, 0.0
          %v997 = vsel %vm964, 1.0, 0.0
          %v998 = vsel %vm965, 1.0, 0.0
          %v999 = vsel %vm966, 1.0, 0.0
          %v1000 = vsel %vm967, 1.0, 0.0
          %v1001 = vsel %vm968, 1.0, 0.0
          %v1002 = vsel %vm969, 1.0, 0.0
          %v1003 = vsel %vm970, 1.0, 0.0
          %v1004 = vsel %vm971, 1.0, 0.0
          %v1005 = vsel %vm972, 1.0, 0.0
          %v1006 = vsel %vm973, 1.0, 0.0
          %v1007 = vsel %vm974, 1.0, 0.0
          %v1008 = vsel %vm975, 1.0, 0.0
          %v1009 = vadd.f32 %v977, %v979
          %v1010 = vadd.f32 %v1009, %v981
          %v1011 = vadd.f32 %v1010, %v983
          %v1012 = vadd.f32 %v1011, %v985
          %v1013 = vadd.f32 %v1012, %v987
          %v1014 = vadd.f32 %v1013, %v989
          %v1015 = vadd.f32 %v1014, %v991
          %v1016 = vadd.f32 %v1015, %v993
          %v1017 = vadd.f32 %v1016, %v995
          %v1018 = vadd.f32 %v1017, %v997
          %v1019 = vadd.f32 %v1018, %v999
          %v1020 = vadd.f32 %v1019, %v1001
          %v1021 = vadd.f32 %v1020, %v1003
          %v1022 = vadd.f32 %v1021, %v1005
          %v1023 = vadd.f32 %v1022, %v1007
          %v1024 = vrot.slane %v1023, 4
          %v1025 = vadd.f32 %v1023, %v1024
          %v1026 = vrot.slane %v1025, 2
          %v1027 = vadd.f32 %v1025, %v1026
          %v1028 = vrot.slane %v1027, 1
          %v1029 = vadd.f32 %v1027, %v1028
          %v1030 = vadd.f32 %v978, %v980
          %v1031 = vadd.f32 %v1030, %v982
          %v1032 = vadd.f32 %v1031, %v984
          %v1033 = vadd.f32 %v1032, %v986
          %v1034 = vadd.f32 %v1033, %v988
          %v1035 = vadd.f32 %v1034, %v990
          %v1036 = vadd.f32 %v1035, %v992
          %v1037 = vadd.f32 %v1036, %v994
          %v1038 = vadd.f32 %v1037, %v996
          %v1039 = vadd.f32 %v1038, %v998
          %v1040 = vadd.f32 %v1039, %v1000
          %v1041 = vadd.f32 %v1040, %v1002
          %v1042 = vadd.f32 %v1041, %v1004
          %v1043 = vadd.f32 %v1042, %v1006
          %v1044 = vadd.f32 %v1043, %v1008
          %v1045 = vrot.slane %v1044, 4
          %v1046 = vadd.f32 %v1044, %v1045
          %v1047 = vrot.slane %v1046, 2
          %v1048 = vadd.f32 %v1046, %v1047
          %v1049 = vrot.slane %v1048, 1
          %v1050 = vadd.f32 %v1048, %v1049
          %v1053 = vcombine.low %v1029, %v1050
          %v1055 = vunpack.c.l.s4 1966171168
          %v1056 = vunpack.c.0.s8 %v1055
          %v1057 = vlaneseq
          %v1058 = vshrl.u32 %v1057, 7
          %v1059 = vsub.s32 %v1056, %v1058
          %v1060 = vrot.slane %v1053, %v1059
          %v1062 = vunpack.c.l.s4 1966171168
          %v1063 = vunpack.c.0.s8 %v1062
          %v1064 = vlaneseq
          %v1065 = vshrl.u32 %v1064, 7
          %v1066 = vsub.s32 %v1063, %v1065
          %v1067 = vrot.slane %v1060, %v1066
          %v1069 = vadd.f32 %v976, %v1067
          %1070 = vst.msk [vmem:[#allocation4] sm:$0x3] %vm685, %v1069
          %v1071 = vld [vmem:[#allocation5] sm:$0x3]
          %v1072 = vsel %vm944, %v913, 0.0
          %v1073 = vsel %vm945, %v913, 0.0
          %v1074 = vsel %vm946, %v915, 0.0
          %v1075 = vsel %vm947, %v915, 0.0
          %v1076 = vsel %vm948, %v917, 0.0
          %v1077 = vsel %vm949, %v917, 0.0
          %v1078 = vsel %vm950, %v919, 0.0
          %v1079 = vsel %vm951, %v919, 0.0
          %v1080 = vsel %vm952, %v921, 0.0
          %v1081 = vsel %vm953, %v921, 0.0
          %v1082 = vsel %vm954, %v923, 0.0
          %v1083 = vsel %vm955, %v923, 0.0
          %v1084 = vsel %vm956, %v925, 0.0
          %v1085 = vsel %vm957, %v925, 0.0
          %v1086 = vsel %vm958, %v927, 0.0
          %v1087 = vsel %vm959, %v927, 0.0
          %v1088 = vsel %vm960, %v929, 0.0
          %v1089 = vsel %vm961, %v929, 0.0
          %v1090 = vsel %vm962, %v931, 0.0
          %v1091 = vsel %vm963, %v931, 0.0
          %v1092 = vsel %vm964, %v933, 0.0
          %v1093 = vsel %vm965, %v933, 0.0
          %v1094 = vsel %vm966, %v935, 0.0
          %v1095 = vsel %vm967, %v935, 0.0
          %v1096 = vsel %vm968, %v937, 0.0
          %v1097 = vsel %vm969, %v937, 0.0
          %v1098 = vsel %vm970, %v939, 0.0
          %v1099 = vsel %vm971, %v939, 0.0
          %v1100 = vsel %vm972, %v941, 0.0
          %v1101 = vsel %vm973, %v941, 0.0
          %v1102 = vsel %vm974, %v943, 0.0
          %v1103 = vsel %vm975, %v943, 0.0
          %v1104 = vadd.f32 %v1072, %v1074
          %v1105 = vadd.f32 %v1104, %v1076
          %v1106 = vadd.f32 %v1105, %v1078
          %v1107 = vadd.f32 %v1106, %v1080
          %v1108 = vadd.f32 %v1107, %v1082
          %v1109 = vadd.f32 %v1108, %v1084
          %v1110 = vadd.f32 %v1109, %v1086
          %v1111 = vadd.f32 %v1110, %v1088
          %v1112 = vadd.f32 %v1111, %v1090
          %v1113 = vadd.f32 %v1112, %v1092
          %v1114 = vadd.f32 %v1113, %v1094
          %v1115 = vadd.f32 %v1114, %v1096
          %v1116 = vadd.f32 %v1115, %v1098
          %v1117 = vadd.f32 %v1116, %v1100
          %v1118 = vadd.f32 %v1117, %v1102
          %v1119 = vrot.slane %v1118, 4
          %v1120 = vadd.f32 %v1118, %v1119
          %v1121 = vrot.slane %v1120, 2
          %v1122 = vadd.f32 %v1120, %v1121
          %v1123 = vrot.slane %v1122, 1
          %v1124 = vadd.f32 %v1122, %v1123
          %v1125 = vadd.f32 %v1073, %v1075
          %v1126 = vadd.f32 %v1125, %v1077
          %v1127 = vadd.f32 %v1126, %v1079
          %v1128 = vadd.f32 %v1127, %v1081
          %v1129 = vadd.f32 %v1128, %v1083
          %v1130 = vadd.f32 %v1129, %v1085
          %v1131 = vadd.f32 %v1130, %v1087
          %v1132 = vadd.f32 %v1131, %v1089
          %v1133 = vadd.f32 %v1132, %v1091
          %v1134 = vadd.f32 %v1133, %v1093
          %v1135 = vadd.f32 %v1134, %v1095
          %v1136 = vadd.f32 %v1135, %v1097
          %v1137 = vadd.f32 %v1136, %v1099
          %v1138 = vadd.f32 %v1137, %v1101
          %v1139 = vadd.f32 %v1138, %v1103
          %v1140 = vrot.slane %v1139, 4
          %v1141 = vadd.f32 %v1139, %v1140
          %v1142 = vrot.slane %v1141, 2
          %v1143 = vadd.f32 %v1141, %v1142
          %v1144 = vrot.slane %v1143, 1
          %v1145 = vadd.f32 %v1143, %v1144
          %v1148 = vcombine.low %v1124, %v1145
          %v1150 = vunpack.c.l.s4 1966171168
          %v1151 = vunpack.c.0.s8 %v1150
          %v1152 = vlaneseq
          %v1153 = vshrl.u32 %v1152, 7
          %v1154 = vsub.s32 %v1151, %v1153
          %v1155 = vrot.slane %v1148, %v1154
          %v1157 = vunpack.c.l.s4 1966171168
          %v1158 = vunpack.c.0.s8 %v1157
          %v1159 = vlaneseq
          %v1160 = vshrl.u32 %v1159, 7
          %v1161 = vsub.s32 %v1158, %v1160
          %v1162 = vrot.slane %v1155, %v1161
          %v1164 = vadd.f32 %v1071, %v1162
          %1165 = vst.msk [vmem:[#allocation5] sm:$0x3] %vm685, %v1164
        $region36: #{tpu_custom_call.1} parent=27 // pred_fallthru
          _
        %p1166 = scmp.eq.s32.totalorder %s22, 1
        // Predicated region
        $region37: #{tpu_custom_call.1} parent=27 // pred_check
          %p1167 = pneg %p1166
        $region38: #{tpu_custom_call.1} parent=27 // pred_check_branch
          %1169 = sbr.rel (%p1167) target = $region40
        $region39: #{tpu_custom_call.1} parent=27 // pred_region
          %v1170 = vlaneseq
          %v1171 = vshrl.u32 %v1170, 7
          %v1172 = vadd.s32 %v1171, 8
          %v1173 = vadd.s32 %v1171, 16
          %v1174 = vadd.s32 %v1171, 24
          %v1175 = vadd.s32 %v1171, 32
          %v1176 = vadd.s32 %v1171, 40
          %v1177 = vadd.s32 %v1171, 48
          %v1178 = vadd.s32 %v1171, 56
          %v1179 = vadd.s32 %v1171, 64
          %v1180 = vadd.s32 %v1171, 72
          %v1181 = vadd.s32 %v1171, 80
          %v1182 = vadd.s32 %v1171, 88
          %v1183 = vadd.s32 %v1171, 96
          %v1184 = vadd.s32 %v1171, 104
          %v1185 = vadd.s32 %v1171, 112
          %v1186 = vadd.s32 %v1171, 120
          %v1187 = vstv %s197
          %v1188 = vadd.s32 %v1187, %v1171
          %v1189 = vadd.s32 %v1187, %v1172
          %v1190 = vadd.s32 %v1187, %v1173
          %v1191 = vadd.s32 %v1187, %v1174
          %v1192 = vadd.s32 %v1187, %v1175
          %v1193 = vadd.s32 %v1187, %v1176
          %v1194 = vadd.s32 %v1187, %v1177
          %v1195 = vadd.s32 %v1187, %v1178
          %v1196 = vadd.s32 %v1187, %v1179
          %v1197 = vadd.s32 %v1187, %v1180
          %v1198 = vadd.s32 %v1187, %v1181
          %v1199 = vadd.s32 %v1187, %v1182
          %v1200 = vadd.s32 %v1187, %v1183
          %v1201 = vadd.s32 %v1187, %v1184
          %v1202 = vadd.s32 %v1187, %v1185
          %v1203 = vadd.s32 %v1187, %v1186
          %v1204 = vcvt.s32.f32 %v1188
          %v1205 = vcvt.s32.f32 %v1189
          %v1206 = vcvt.s32.f32 %v1190
          %v1207 = vcvt.s32.f32 %v1191
          %v1208 = vcvt.s32.f32 %v1192
          %v1209 = vcvt.s32.f32 %v1193
          %v1210 = vcvt.s32.f32 %v1194
          %v1211 = vcvt.s32.f32 %v1195
          %v1212 = vcvt.s32.f32 %v1196
          %v1213 = vcvt.s32.f32 %v1197
          %v1214 = vcvt.s32.f32 %v1198
          %v1215 = vcvt.s32.f32 %v1199
          %v1216 = vcvt.s32.f32 %v1200
          %v1217 = vcvt.s32.f32 %v1201
          %v1218 = vcvt.s32.f32 %v1202
          %v1219 = vcvt.s32.f32 %v1203
          %v1220 = vld [vmem:[#allocation3] sm:$0x3]
          %v1222 = vlaneseq
          %v1223 = vshrl.u32 %v1222, 7
          %v1224 = vsub.s32 0, %v1223
          %v1225 = vrot.slane %v1220, %v1224
          %v1226 = vlaneseq
          %v1227 = vshrl.u32 %v1226, 7
          %v1228 = vsub.s32 1, %v1227
          %v1229 = vrot.slane %v1220, %v1228
          %vm1232 = vcmp.eq.f32.partialorder %v1204, %v1225
          %vm1233 = vcmp.eq.f32.partialorder %v1204, %v1229
          %vm1234 = vcmp.eq.f32.partialorder %v1205, %v1225
          %vm1235 = vcmp.eq.f32.partialorder %v1205, %v1229
          %vm1236 = vcmp.eq.f32.partialorder %v1206, %v1225
          %vm1237 = vcmp.eq.f32.partialorder %v1206, %v1229
          %vm1238 = vcmp.eq.f32.partialorder %v1207, %v1225
          %vm1239 = vcmp.eq.f32.partialorder %v1207, %v1229
          %vm1240 = vcmp.eq.f32.partialorder %v1208, %v1225
          %vm1241 = vcmp.eq.f32.partialorder %v1208, %v1229
          %vm1242 = vcmp.eq.f32.partialorder %v1209, %v1225
          %vm1243 = vcmp.eq.f32.partialorder %v1209, %v1229
          %vm1244 = vcmp.eq.f32.partialorder %v1210, %v1225
          %vm1245 = vcmp.eq.f32.partialorder %v1210, %v1229
          %vm1246 = vcmp.eq.f32.partialorder %v1211, %v1225
          %vm1247 = vcmp.eq.f32.partialorder %v1211, %v1229
          %vm1248 = vcmp.eq.f32.partialorder %v1212, %v1225
          %vm1249 = vcmp.eq.f32.partialorder %v1212, %v1229
          %vm1250 = vcmp.eq.f32.partialorder %v1213, %v1225
          %vm1251 = vcmp.eq.f32.partialorder %v1213, %v1229
          %vm1252 = vcmp.eq.f32.partialorder %v1214, %v1225
          %vm1253 = vcmp.eq.f32.partialorder %v1214, %v1229
          %vm1254 = vcmp.eq.f32.partialorder %v1215, %v1225
          %vm1255 = vcmp.eq.f32.partialorder %v1215, %v1229
          %vm1256 = vcmp.eq.f32.partialorder %v1216, %v1225
          %vm1257 = vcmp.eq.f32.partialorder %v1216, %v1229
          %vm1258 = vcmp.eq.f32.partialorder %v1217, %v1225
          %vm1259 = vcmp.eq.f32.partialorder %v1217, %v1229
          %vm1260 = vcmp.eq.f32.partialorder %v1218, %v1225
          %vm1261 = vcmp.eq.f32.partialorder %v1218, %v1229
          %vm1262 = vcmp.eq.f32.partialorder %v1219, %v1225
          %vm1263 = vcmp.eq.f32.partialorder %v1219, %v1229
          %v1264 = vld [vmem:[#allocation2] sm:$0x3]
          %v1265 = vmax.f32 %v1264, 0.0
          %v1266 = vmul.f32 %v1265, -50.0
          %v1267 = vmul.f32 %v1266, 1.442695
          %v1268 = vpow.pop %v1267
          %v1269 = vsel %vm1232, 1.0, 0.0
          %v1270 = vsel %vm1233, 1.0, 0.0
          %v1271 = vsel %vm1234, 1.0, 0.0
          %v1272 = vsel %vm1235, 1.0, 0.0
          %v1273 = vsel %vm1236, 1.0, 0.0
          %v1274 = vsel %vm1237, 1.0, 0.0
          %v1275 = vsel %vm1238, 1.0, 0.0
          %v1276 = vsel %vm1239, 1.0, 0.0
          %v1277 = vsel %vm1240, 1.0, 0.0
          %v1278 = vsel %vm1241, 1.0, 0.0
          %v1279 = vsel %vm1242, 1.0, 0.0
          %v1280 = vsel %vm1243, 1.0, 0.0
          %v1281 = vsel %vm1244, 1.0, 0.0
          %v1282 = vsel %vm1245, 1.0, 0.0
          %v1283 = vsel %vm1246, 1.0, 0.0
          %v1284 = vsel %vm1247, 1.0, 0.0
          %v1285 = vsel %vm1248, 1.0, 0.0
          %v1286 = vsel %vm1249, 1.0, 0.0
          %v1287 = vsel %vm1250, 1.0, 0.0
          %v1288 = vsel %vm1251, 1.0, 0.0
          %v1289 = vsel %vm1252, 1.0, 0.0
          %v1290 = vsel %vm1253, 1.0, 0.0
          %v1291 = vsel %vm1254, 1.0, 0.0
          %v1292 = vsel %vm1255, 1.0, 0.0
          %v1293 = vsel %vm1256, 1.0, 0.0
          %v1294 = vsel %vm1257, 1.0, 0.0
          %v1295 = vsel %vm1258, 1.0, 0.0
          %v1296 = vsel %vm1259, 1.0, 0.0
          %v1297 = vsel %vm1260, 1.0, 0.0
          %v1298 = vsel %vm1261, 1.0, 0.0
          %v1299 = vsel %vm1262, 1.0, 0.0
          %v1300 = vsel %vm1263, 1.0, 0.0
          %v1301 = vadd.f32 %v1269, %v1270
          %1302 = vadd.xlane.f32.xlu0 %v1301
          %v1303 = vpop.xlane.xlu0 %1302
          %v1304 = vadd.f32 %v1271, %v1272
          %1305 = vadd.xlane.f32.xlu0 %v1304
          %v1306 = vpop.xlane.xlu0 %1305
          %v1307 = vadd.f32 %v1273, %v1274
          %1308 = vadd.xlane.f32.xlu0 %v1307
          %v1309 = vpop.xlane.xlu0 %1308
          %v1310 = vadd.f32 %v1275, %v1276
          %1311 = vadd.xlane.f32.xlu0 %v1310
          %v1312 = vpop.xlane.xlu0 %1311
          %v1313 = vadd.f32 %v1277, %v1278
          %1314 = vadd.xlane.f32.xlu0 %v1313
          %v1315 = vpop.xlane.xlu0 %1314
          %v1316 = vadd.f32 %v1279, %v1280
          %1317 = vadd.xlane.f32.xlu0 %v1316
          %v1318 = vpop.xlane.xlu0 %1317
          %v1319 = vadd.f32 %v1281, %v1282
          %1320 = vadd.xlane.f32.xlu0 %v1319
          %v1321 = vpop.xlane.xlu0 %1320
          %v1322 = vadd.f32 %v1283, %v1284
          %1323 = vadd.xlane.f32.xlu0 %v1322
          %v1324 = vpop.xlane.xlu0 %1323
          %v1325 = vadd.f32 %v1285, %v1286
          %1326 = vadd.xlane.f32.xlu0 %v1325
          %v1327 = vpop.xlane.xlu0 %1326
          %v1328 = vadd.f32 %v1287, %v1288
          %1329 = vadd.xlane.f32.xlu0 %v1328
          %v1330 = vpop.xlane.xlu0 %1329
          %v1331 = vadd.f32 %v1289, %v1290
          %1332 = vadd.xlane.f32.xlu0 %v1331
          %v1333 = vpop.xlane.xlu0 %1332
          %v1334 = vadd.f32 %v1291, %v1292
          %1335 = vadd.xlane.f32.xlu0 %v1334
          %v1336 = vpop.xlane.xlu0 %1335
          %v1337 = vadd.f32 %v1293, %v1294
          %1338 = vadd.xlane.f32.xlu0 %v1337
          %v1339 = vpop.xlane.xlu0 %1338
          %v1340 = vadd.f32 %v1295, %v1296
          %1341 = vadd.xlane.f32.xlu0 %v1340
          %v1342 = vpop.xlane.xlu0 %1341
          %v1343 = vadd.f32 %v1297, %v1298
          %1344 = vadd.xlane.f32.xlu0 %v1343
          %v1345 = vpop.xlane.xlu0 %1344
          %v1346 = vadd.f32 %v1299, %v1300
          %1347 = vadd.xlane.f32.xlu0 %v1346
          %v1348 = vpop.xlane.xlu0 %1347
          %v1350 = vlaneseq
          %v1351 = vshrl.u32 %v1350, 7
          %v1352 = vsub.s32 0, %v1351
          %v1353 = vrot.slane %v1268, %v1352
          %v1354 = vlaneseq
          %v1355 = vshrl.u32 %v1354, 7
          %v1356 = vsub.s32 1, %v1355
          %v1357 = vrot.slane %v1268, %v1356
          %v1360 = vsel %vm1232, %v1353, 0.0
          %v1361 = vsel %vm1233, %v1357, 0.0
          %v1362 = vsel %vm1234, %v1353, 0.0
          %v1363 = vsel %vm1235, %v1357, 0.0
          %v1364 = vsel %vm1236, %v1353, 0.0
          %v1365 = vsel %vm1237, %v1357, 0.0
          %v1366 = vsel %vm1238, %v1353, 0.0
          %v1367 = vsel %vm1239, %v1357, 0.0
          %v1368 = vsel %vm1240, %v1353, 0.0
          %v1369 = vsel %vm1241, %v1357, 0.0
          %v1370 = vsel %vm1242, %v1353, 0.0
          %v1371 = vsel %vm1243, %v1357, 0.0
          %v1372 = vsel %vm1244, %v1353, 0.0
          %v1373 = vsel %vm1245, %v1357, 0.0
          %v1374 = vsel %vm1246, %v1353, 0.0
          %v1375 = vsel %vm1247, %v1357, 0.0
          %v1376 = vsel %vm1248, %v1353, 0.0
          %v1377 = vsel %vm1249, %v1357, 0.0
          %v1378 = vsel %vm1250, %v1353, 0.0
          %v1379 = vsel %vm1251, %v1357, 0.0
          %v1380 = vsel %vm1252, %v1353, 0.0
          %v1381 = vsel %vm1253, %v1357, 0.0
          %v1382 = vsel %vm1254, %v1353, 0.0
          %v1383 = vsel %vm1255, %v1357, 0.0
          %v1384 = vsel %vm1256, %v1353, 0.0
          %v1385 = vsel %vm1257, %v1357, 0.0
          %v1386 = vsel %vm1258, %v1353, 0.0
          %v1387 = vsel %vm1259, %v1357, 0.0
          %v1388 = vsel %vm1260, %v1353, 0.0
          %v1389 = vsel %vm1261, %v1357, 0.0
          %v1390 = vsel %vm1262, %v1353, 0.0
          %v1391 = vsel %vm1263, %v1357, 0.0
          %v1392 = vadd.f32 %v1360, %v1361
          %1393 = vadd.xlane.f32.xlu0 %v1392
          %v1394 = vpop.xlane.xlu0 %1393
          %v1395 = vadd.f32 %v1362, %v1363
          %1396 = vadd.xlane.f32.xlu0 %v1395
          %v1397 = vpop.xlane.xlu0 %1396
          %v1398 = vadd.f32 %v1364, %v1365
          %1399 = vadd.xlane.f32.xlu0 %v1398
          %v1400 = vpop.xlane.xlu0 %1399
          %v1401 = vadd.f32 %v1366, %v1367
          %1402 = vadd.xlane.f32.xlu0 %v1401
          %v1403 = vpop.xlane.xlu0 %1402
          %v1404 = vadd.f32 %v1368, %v1369
          %1405 = vadd.xlane.f32.xlu0 %v1404
          %v1406 = vpop.xlane.xlu0 %1405
          %v1407 = vadd.f32 %v1370, %v1371
          %1408 = vadd.xlane.f32.xlu0 %v1407
          %v1409 = vpop.xlane.xlu0 %1408
          %v1410 = vadd.f32 %v1372, %v1373
          %1411 = vadd.xlane.f32.xlu0 %v1410
          %v1412 = vpop.xlane.xlu0 %1411
          %v1413 = vadd.f32 %v1374, %v1375
          %1414 = vadd.xlane.f32.xlu0 %v1413
          %v1415 = vpop.xlane.xlu0 %1414
          %v1416 = vadd.f32 %v1376, %v1377
          %1417 = vadd.xlane.f32.xlu0 %v1416
          %v1418 = vpop.xlane.xlu0 %1417
          %v1419 = vadd.f32 %v1378, %v1379
          %1420 = vadd.xlane.f32.xlu0 %v1419
          %v1421 = vpop.xlane.xlu0 %1420
          %v1422 = vadd.f32 %v1380, %v1381
          %1423 = vadd.xlane.f32.xlu0 %v1422
          %v1424 = vpop.xlane.xlu0 %1423
          %v1425 = vadd.f32 %v1382, %v1383
          %1426 = vadd.xlane.f32.xlu0 %v1425
          %v1427 = vpop.xlane.xlu0 %1426
          %v1428 = vadd.f32 %v1384, %v1385
          %1429 = vadd.xlane.f32.xlu0 %v1428
          %v1430 = vpop.xlane.xlu0 %1429
          %v1431 = vadd.f32 %v1386, %v1387
          %1432 = vadd.xlane.f32.xlu0 %v1431
          %v1433 = vpop.xlane.xlu0 %1432
          %v1434 = vadd.f32 %v1388, %v1389
          %1435 = vadd.xlane.f32.xlu0 %v1434
          %v1436 = vpop.xlane.xlu0 %1435
          %v1437 = vadd.f32 %v1390, %v1391
          %1438 = vadd.xlane.f32.xlu0 %v1437
          %v1439 = vpop.xlane.xlu0 %1438
          %v1440 = vld [vmem:[#allocation6] sm:$0x1]
          %v1441 = vrsqrt.pop %v1303
          %v1442 = vmul.f32 %v1303, %v1441
          %vm1443 = vcmp.eq.f32.partialorder %v1303, inf
          %v1444 = vsel %vm1443, %v1303, %v1442
          %vm1445 = vcmp.eq.f32.partialorder %v1303, 0.0
          %v1446 = vand.u32 %v1303, 2147483648
          %v1447 = vsel %vm1445, %v1446, %v1444
          %v1448 = vrsqrt.pop %v1306
          %v1449 = vmul.f32 %v1306, %v1448
          %vm1450 = vcmp.eq.f32.partialorder %v1306, inf
          %v1451 = vsel %vm1450, %v1306, %v1449
          %vm1452 = vcmp.eq.f32.partialorder %v1306, 0.0
          %v1453 = vand.u32 %v1306, 2147483648
          %v1454 = vsel %vm1452, %v1453, %v1451
          %v1455 = vrsqrt.pop %v1309
          %v1456 = vmul.f32 %v1309, %v1455
          %vm1457 = vcmp.eq.f32.partialorder %v1309, inf
          %v1458 = vsel %vm1457, %v1309, %v1456
          %vm1459 = vcmp.eq.f32.partialorder %v1309, 0.0
          %v1460 = vand.u32 %v1309, 2147483648
          %v1461 = vsel %vm1459, %v1460, %v1458
          %v1462 = vrsqrt.pop %v1312
          %v1463 = vmul.f32 %v1312, %v1462
          %vm1464 = vcmp.eq.f32.partialorder %v1312, inf
          %v1465 = vsel %vm1464, %v1312, %v1463
          %vm1466 = vcmp.eq.f32.partialorder %v1312, 0.0
          %v1467 = vand.u32 %v1312, 2147483648
          %v1468 = vsel %vm1466, %v1467, %v1465
          %v1469 = vrsqrt.pop %v1315
          %v1470 = vmul.f32 %v1315, %v1469
          %vm1471 = vcmp.eq.f32.partialorder %v1315, inf
          %v1472 = vsel %vm1471, %v1315, %v1470
          %vm1473 = vcmp.eq.f32.partialorder %v1315, 0.0
          %v1474 = vand.u32 %v1315, 2147483648
          %v1475 = vsel %vm1473, %v1474, %v1472
          %v1476 = vrsqrt.pop %v1318
          %v1477 = vmul.f32 %v1318, %v1476
          %vm1478 = vcmp.eq.f32.partialorder %v1318, inf
          %v1479 = vsel %vm1478, %v1318, %v1477
          %vm1480 = vcmp.eq.f32.partialorder %v1318, 0.0
          %v1481 = vand.u32 %v1318, 2147483648
          %v1482 = vsel %vm1480, %v1481, %v1479
          %v1483 = vrsqrt.pop %v1321
          %v1484 = vmul.f32 %v1321, %v1483
          %vm1485 = vcmp.eq.f32.partialorder %v1321, inf
          %v1486 = vsel %vm1485, %v1321, %v1484
          %vm1487 = vcmp.eq.f32.partialorder %v1321, 0.0
          %v1488 = vand.u32 %v1321, 2147483648
          %v1489 = vsel %vm1487, %v1488, %v1486
          %v1490 = vrsqrt.pop %v1324
          %v1491 = vmul.f32 %v1324, %v1490
          %vm1492 = vcmp.eq.f32.partialorder %v1324, inf
          %v1493 = vsel %vm1492, %v1324, %v1491
          %vm1494 = vcmp.eq.f32.partialorder %v1324, 0.0
          %v1495 = vand.u32 %v1324, 2147483648
          %v1496 = vsel %vm1494, %v1495, %v1493
          %v1497 = vrsqrt.pop %v1327
          %v1498 = vmul.f32 %v1327, %v1497
          %vm1499 = vcmp.eq.f32.partialorder %v1327, inf
          %v1500 = vsel %vm1499, %v1327, %v1498
          %vm1501 = vcmp.eq.f32.partialorder %v1327, 0.0
          %v1502 = vand.u32 %v1327, 2147483648
          %v1503 = vsel %vm1501, %v1502, %v1500
          %v1504 = vrsqrt.pop %v1330
          %v1505 = vmul.f32 %v1330, %v1504
          %vm1506 = vcmp.eq.f32.partialorder %v1330, inf
          %v1507 = vsel %vm1506, %v1330, %v1505
          %vm1508 = vcmp.eq.f32.partialorder %v1330, 0.0
          %v1509 = vand.u32 %v1330, 2147483648
          %v1510 = vsel %vm1508, %v1509, %v1507
          %v1511 = vrsqrt.pop %v1333
          %v1512 = vmul.f32 %v1333, %v1511
          %vm1513 = vcmp.eq.f32.partialorder %v1333, inf
          %v1514 = vsel %vm1513, %v1333, %v1512
          %vm1515 = vcmp.eq.f32.partialorder %v1333, 0.0
          %v1516 = vand.u32 %v1333, 2147483648
          %v1517 = vsel %vm1515, %v1516, %v1514
          %v1518 = vrsqrt.pop %v1336
          %v1519 = vmul.f32 %v1336, %v1518
          %vm1520 = vcmp.eq.f32.partialorder %v1336, inf
          %v1521 = vsel %vm1520, %v1336, %v1519
          %vm1522 = vcmp.eq.f32.partialorder %v1336, 0.0
          %v1523 = vand.u32 %v1336, 2147483648
          %v1524 = vsel %vm1522, %v1523, %v1521
          %v1525 = vrsqrt.pop %v1339
          %v1526 = vmul.f32 %v1339, %v1525
          %vm1527 = vcmp.eq.f32.partialorder %v1339, inf
          %v1528 = vsel %vm1527, %v1339, %v1526
          %vm1529 = vcmp.eq.f32.partialorder %v1339, 0.0
          %v1530 = vand.u32 %v1339, 2147483648
          %v1531 = vsel %vm1529, %v1530, %v1528
          %v1532 = vrsqrt.pop %v1342
          %v1533 = vmul.f32 %v1342, %v1532
          %vm1534 = vcmp.eq.f32.partialorder %v1342, inf
          %v1535 = vsel %vm1534, %v1342, %v1533
          %vm1536 = vcmp.eq.f32.partialorder %v1342, 0.0
          %v1537 = vand.u32 %v1342, 2147483648
          %v1538 = vsel %vm1536, %v1537, %v1535
          %v1539 = vrsqrt.pop %v1345
          %v1540 = vmul.f32 %v1345, %v1539
          %vm1541 = vcmp.eq.f32.partialorder %v1345, inf
          %v1542 = vsel %vm1541, %v1345, %v1540
          %vm1543 = vcmp.eq.f32.partialorder %v1345, 0.0
          %v1544 = vand.u32 %v1345, 2147483648
          %v1545 = vsel %vm1543, %v1544, %v1542
          %v1546 = vrsqrt.pop %v1348
          %v1547 = vmul.f32 %v1348, %v1546
          %vm1548 = vcmp.eq.f32.partialorder %v1348, inf
          %v1549 = vsel %vm1548, %v1348, %v1547
          %vm1550 = vcmp.eq.f32.partialorder %v1348, 0.0
          %v1551 = vand.u32 %v1348, 2147483648
          %v1552 = vsel %vm1550, %v1551, %v1549
          %v1553 = vadd.f32 %v1447, 1e-06
          %v1554 = vadd.f32 %v1454, 1e-06
          %v1555 = vadd.f32 %v1461, 1e-06
          %v1556 = vadd.f32 %v1468, 1e-06
          %v1557 = vadd.f32 %v1475, 1e-06
          %v1558 = vadd.f32 %v1482, 1e-06
          %v1559 = vadd.f32 %v1489, 1e-06
          %v1560 = vadd.f32 %v1496, 1e-06
          %v1561 = vadd.f32 %v1503, 1e-06
          %v1562 = vadd.f32 %v1510, 1e-06
          %v1563 = vadd.f32 %v1517, 1e-06
          %v1564 = vadd.f32 %v1524, 1e-06
          %v1565 = vadd.f32 %v1531, 1e-06
          %v1566 = vadd.f32 %v1538, 1e-06
          %v1567 = vadd.f32 %v1545, 1e-06
          %v1568 = vadd.f32 %v1552, 1e-06
          %v1569 = vrcp.pop %v1553
          %v1570 = vmul.f32 %v1394, %v1569
          %v1571 = vrcp.pop %v1554
          %v1572 = vmul.f32 %v1397, %v1571
          %v1573 = vrcp.pop %v1555
          %v1574 = vmul.f32 %v1400, %v1573
          %v1575 = vrcp.pop %v1556
          %v1576 = vmul.f32 %v1403, %v1575
          %v1577 = vrcp.pop %v1557
          %v1578 = vmul.f32 %v1406, %v1577
          %v1579 = vrcp.pop %v1558
          %v1580 = vmul.f32 %v1409, %v1579
          %v1581 = vrcp.pop %v1559
          %v1582 = vmul.f32 %v1412, %v1581
          %v1583 = vrcp.pop %v1560
          %v1584 = vmul.f32 %v1415, %v1583
          %v1585 = vrcp.pop %v1561
          %v1586 = vmul.f32 %v1418, %v1585
          %v1587 = vrcp.pop %v1562
          %v1588 = vmul.f32 %v1421, %v1587
          %v1589 = vrcp.pop %v1563
          %v1590 = vmul.f32 %v1424, %v1589
          %v1591 = vrcp.pop %v1564
          %v1592 = vmul.f32 %v1427, %v1591
          %v1593 = vrcp.pop %v1565
          %v1594 = vmul.f32 %v1430, %v1593
          %v1595 = vrcp.pop %v1566
          %v1596 = vmul.f32 %v1433, %v1595
          %v1597 = vrcp.pop %v1567
          %v1598 = vmul.f32 %v1436, %v1597
          %v1599 = vrcp.pop %v1568
          %v1600 = vmul.f32 %v1439, %v1599
          %v1601 = vadd.f32 %v1570, %v1572
          %v1602 = vadd.f32 %v1601, %v1574
          %v1603 = vadd.f32 %v1602, %v1576
          %v1604 = vadd.f32 %v1603, %v1578
          %v1605 = vadd.f32 %v1604, %v1580
          %v1606 = vadd.f32 %v1605, %v1582
          %v1607 = vadd.f32 %v1606, %v1584
          %v1608 = vadd.f32 %v1607, %v1586
          %v1609 = vadd.f32 %v1608, %v1588
          %v1610 = vadd.f32 %v1609, %v1590
          %v1611 = vadd.f32 %v1610, %v1592
          %v1612 = vadd.f32 %v1611, %v1594
          %v1613 = vadd.f32 %v1612, %v1596
          %v1614 = vadd.f32 %v1613, %v1598
          %v1615 = vadd.f32 %v1614, %v1600
          %v1616 = vrot.slane %v1615, 4
          %v1617 = vadd.f32 %v1615, %v1616
          %v1618 = vrot.slane %v1617, 2
          %v1619 = vadd.f32 %v1617, %v1618
          %v1620 = vrot.slane %v1619, 1
          %v1621 = vadd.f32 %v1619, %v1620
          %v1622 = vadd.f32 %v1440, %v1621
          %vm1623 = vcmask 0
          %1624 = vst.msk [vmem:[#allocation6] sm:$0x1] %vm1623, %v1622
        $region40: #{tpu_custom_call.1} parent=27 // pred_fallthru
          _
        %p1625 = pnand %p1166, %p199
        %p1626 = pneg %p1625
        // Predicated region
        $region41: #{tpu_custom_call.1} parent=27 // pred_check
          _
        $region42: #{tpu_custom_call.1} parent=27 // pred_check_branch
          %1628 = sbr.rel (%p1625) target = $region44
        $region43: #{tpu_custom_call.1} parent=27 // pred_region
          %v1629 = vld [vmem:[#allocation5] sm:$0x3]
          %v1630 = vld [vmem:[#allocation4] sm:$0x3]
          %v1631 = vrsqrt.pop %v1630
          %v1632 = vmul.f32 %v1630, %v1631
          %vm1633 = vcmp.eq.f32.partialorder %v1630, inf
          %v1634 = vsel %vm1633, %v1630, %v1632
          %vm1635 = vcmp.eq.f32.partialorder %v1630, 0.0
          %v1636 = vand.u32 %v1630, 2147483648
          %v1637 = vsel %vm1635, %v1636, %v1634
          %v1638 = vadd.f32 %v1637, 1e-06
          %v1639 = vrcp.pop %v1638
          %v1640 = vmul.f32 %v1629, %v1639
          %v1642 = vlaneseq
          %v1643 = vshrl.u32 %v1642, 7
          %v1644 = vsub.s32 0, %v1643
          %v1645 = vrot.slane %v1640, %v1644
          %v1646 = vlaneseq
          %v1647 = vshrl.u32 %v1646, 7
          %v1648 = vsub.s32 1, %v1647
          %v1649 = vrot.slane %v1640, %v1648
          %vm1652 = vcmask 1040384
          %v1653 = vsel %vm1652, %v1645, 0.0
          %v1654 = vsel %vm1652, %v1649, 0.0
          %v1655 = vadd.f32 %v1653, %v1654
          %1656 = vadd.xlane.f32.xlu0 %v1655
          %v1657 = vpop.xlane.xlu0 %1656
          %v1658 = vld [vmem:[#allocation6] sm:$0x1]
          %v1659 = vmul.f32 %v1658, 0.0078125
          %v1660 = vsub.f32 1.0, %v1659
          %v1661 = vmul.f32 %v1657, 0.00390625
          %v1662 = vsub.f32 1.0, %v1661
          %v1663 = vadd.f32 %v1660, %v1662
          %v1664 = vmul.f32 %v1663, 0.5
          %v1666 = vlaneseq
          %v1667 = vshrl.u32 %v1666, 7
          %v1668 = vsub.s32 0, %v1667
          %v1669 = vrot.slane %v1664, %v1668
          %1670 = vset.pattern.permute.xlu0 0
          %1671 = vperm.xlu0 %1670, %v1669
          %v1672 = vpop.permute.xlu0 %1671
          %1674 = vst [vmem:[%s181] sm:$0xff] %v1672
        $region44: #{tpu_custom_call.1} parent=27 // pred_fallthru
          _
        %s1675 = sand.u32 %s97, 1
        %s1676 = scalar_lea.sflag [#allocation8], %s1675
        %s1677 = sand.u32 %s97, 1
        %s1678 = smul.addr %s1677, 8
        %s1679 = scalar_lea.vmem [#allocation7], %s1678
        // Predicated region
        $region45: #{tpu_custom_call.1} parent=27 // pred_check
          %p1680 = pneg %p107
        $region46: #{tpu_custom_call.1} parent=27 // pred_check_branch
          %1682 = sbr.rel (%p1680) target = $region48
        $region47: #{tpu_custom_call.1} parent=27 // pred_region
          %s1684 = ssub.s32 128, 128
          %1685 = vsyncadd %s1676, %s1684
          %s1686 = smul.addr %s21, 128
          %s1687 = scalar_lea.hbm %s2, %s1686
          %s1689 = sshll.u32 %s1679, 4
          %s1690 = int_to_ptr.vmem [resolvable:$true] %s1689
          %1692 = dma.vmem_to_hbm [thread:$0]  %s1690, 128, %s1687, %s1676
        $region48: #{tpu_custom_call.1} parent=27 // pred_fallthru
          _
      $region28: #{tpu_custom_call.1} parent=5 // pred_fallthru
        _
      %p1693 = scmp.le.s32.totalorder 2, %s11
      // Predicated region
      $region49: #{tpu_custom_call.1} parent=5 // pred_check
        %p1694 = pneg %p1693
      $region50: #{tpu_custom_call.1} parent=5 // pred_check_branch
        %1696 = sbr.rel (%p1694) target = $region52
      $region51: #{tpu_custom_call.1} parent=5 // pred_region
        %s1697 = ssub.s32 %s11, 2
        // Predicated region
        $region53: #{tpu_custom_call.1} parent=51 // pred_check
          %p1698 = pneg %p113
        $region54: #{tpu_custom_call.1} parent=51 // pred_check_branch
          %1700 = sbr.rel (%p1698) target = $region56
        $region55: #{tpu_custom_call.1} parent=51 // pred_region
          %s1701 = sand.u32 %s98, 1
          %s1702 = scalar_lea.sflag [#allocation8], %s1701
          %s1703 = sand.u32 %s98, 1
          %s1704 = smul.addr %s1703, 8
          %s1705 = scalar_lea.vmem [#allocation7], %s1704
          %1706 = dma.done %s1702, 128
        $region56: #{tpu_custom_call.1} parent=51 // pred_fallthru
          _
      $region52: #{tpu_custom_call.1} parent=5 // pred_fallthru
        _
    $region6: #{tpu_custom_call.1} parent=1 // loop_footer
      %s15 = sadd.s32 1, %s11
    $region7: #{tpu_custom_call.1} parent=1 // loop_footer_branch
      %10 = sbr.rel target = $region3
    $region8: #{tpu_custom_call.1} parent=1 // loop_exit
      _
    %1707 = vsyncpa [#allocation8], 1
    %s1708 = scalar_lea.sflag [#allocation8], 1
    %1709 = vsyncpa %s1708, 1

</llo_original>
